<compile_context>
chip_gen: v7x
topology: tpu7x:2x2x1
jax: 0.10.0
libtpu: 0.0.40
codegen_flags: <defaults>
</compile_context>

<pallas_src>
import functools

import jax
import jax.numpy as jnp
from jax import lax
from jax.experimental import pallas as pl
from jax.experimental.pallas import tpu as pltpu


def _lstm_decoder_kernel(
    x_ref,       # (T*B, H)   whole input sequence, rows ordered t*B + b (B = padded batch)
    wih_ref,     # (H, 4L)    transposed weight_ih_l0, g-gate block pre-scaled by 2
    whh_ref,     # (L, 4L)    transposed weight_hh_l0, g-gate block pre-scaled by 2
    b_ref,       # (1, 4L)    b_ih + b_hh, g-gate block pre-scaled by 2
    wh_ref,      # (L, P)     [W_mean^T | W_sigma^T | 0-pad], P multiple of 128
    bh_ref,      # (1, P)     [b_mean   | b_sigma   | 0-pad]
    out_ref,     # (T*B, P)   packed heads: mean in [:F], tanh(logvar) in [F:2F]
    gx_ref,      # VMEM scratch (T*B, 4L) f32 — hoisted input projection
    hs_ref,      # VMEM scratch (T*B, L)  f32 — per-step hidden states
    *,
    T: int,
    B: int,      # padded batch, multiple of 8
    L: int,
    F: int,
):
    # ---- hoisted input projection: ONE big matmul + bias add, stored to VMEM scratch
    # so the recurrence reads sublane-aligned slices from a ref (bounded live ranges).
    gx_ref[...] = (
        jnp.dot(x_ref[...], wih_ref[...], preferred_element_type=jnp.float32)
        + b_ref[...]
    )                                         # (T*B, 4L)
    whh = whh_ref[...]                        # (L, 4L), loaded once
    # TODO(synk): on v7x, hold whh resident in the MXU via pltpu.matmul_push_rhs /
    # matmul_acc_lhs / matmul_pop and accumulate the gx slice in the MRB instead of
    # the VALU add below; and shard the (independent) batch over the 2 TensorCores
    # when each shard keeps >= 8 sublanes of batch.

    def step(t, carry):
        h, c = carry
        row = pl.multiple_of(t * B, 8)        # B % 8 == 0 → sublane-aligned slices
        gates = gx_ref[pl.ds(row, B), :] + jnp.dot(
            h.astype(whh.dtype), whh, preferred_element_type=jnp.float32
        )                                     # (B, 4L), PyTorch gate order i, f, g, o
        sig = jax.nn.sigmoid(gates)           # single EUP pass over all 4L lanes
        i_g = sig[:, 0 * L:1 * L]
        f_g = sig[:, 1 * L:2 * L]
        g_g = 2.0 * sig[:, 2 * L:3 * L] - 1.0  # = tanh(orig g): g-gate weights pre-scaled by 2
        o_g = sig[:, 3 * L:4 * L]
        c = f_g * c + i_g * g_g
        h = o_g * jnp.tanh(c)
        hs_ref[pl.ds(row, B), :] = h          # store per step: bounds vreg live ranges
        return (h, c)

    h0 = jnp.zeros((B, L), jnp.float32)
    c0 = jnp.zeros((B, L), jnp.float32)
    lax.fori_loop(0, T, step, (h0, c0), unroll=True if T <= 16 else 4)

    # ---- heads hoisted out of the recurrence:
    # one softplus slab + ONE matmul against the packed lane-dense head weight.
    h_all = hs_ref[...]                       # (T*B, L)
    sp = jnp.maximum(h_all, 0.0) + jnp.log1p(jnp.exp(-jnp.abs(h_all)))
    heads = (
        jnp.dot(sp.astype(wh_ref.dtype), wh_ref[...],
                preferred_element_type=jnp.float32)
        + bh_ref[...]
    )                                         # (T*B, P)

    # tanh only on the logvar columns [F, 2F); (1, P) column mask broadcast by where
    # (no full (T*B, P) iota slab).
    col = lax.broadcasted_iota(jnp.int32, (1, heads.shape[1]), 1)
    is_logvar = jnp.logical_and(col >= F, col < 2 * F)
    heads = jnp.where(is_logvar, jnp.tanh(heads), heads)

    out_ref[...] = heads.astype(out_ref.dtype)   # single unmasked lane-dense store


def lstm_decoder_forward(batch, params, *, use_bf16_weights=False):
    """batch: [T, B, hidden_size] float32. Returns (z_mean, z_logvar), each [T, B, n_features]."""
    T, B, H = batch.shape
    wih_t = params["wih_t"]      # (H, 4L)
    whh_t = params["whh_t"]      # (L, 4L)
    bias = params["bias"]        # (1, 4L)
    wm_t = params["wm_t"]        # (L, F)
    bm = params["bm"]            # (1, F)
    ws_t = params["ws_t"]        # (L, F)
    bs = params["bs"]            # (1, F)
    L = whh_t.shape[0]
    F = wm_t.shape[1]

    # Pre-scale the g-gate block (i, f, g, o order → block 2) by 2, so the kernel can
    # recover tanh(g) = 2*sigmoid(2g) - 1 from its single sigmoid pass.
    wih_s = wih_t.at[:, 2 * L:3 * L].multiply(2.0)
    whh_s = whh_t.at[:, 2 * L:3 * L].multiply(2.0)
    bias_s = bias.at[:, 2 * L:3 * L].multiply(2.0)

    # Pack both heads into one lane-dense weight (width P = multiple of 128).
    P = pl.cdiv(2 * F, 128) * 128
    w_heads = jnp.zeros((L, P), jnp.float32).at[:, :F].set(wm_t).at[:, F:2 * F].set(ws_t)
    b_heads = jnp.zeros((1, P), jnp.float32).at[:, :F].set(bm).at[:, F:2 * F].set(bs)

    # Optional bf16 weight path for the big hoisted matmuls (h/c state and all
    # accumulation stay f32 inside the kernel).
    w_dtype = jnp.bfloat16 if use_bf16_weights else jnp.float32
    wih_s = wih_s.astype(w_dtype)
    whh_s = whh_s.astype(w_dtype)
    w_heads = w_heads.astype(w_dtype)

    # Pad batch to a sublane multiple (8 for f32) and flatten time-major:
    # row index = t*B_pad + b.  Padded rows are dropped after the kernel.
    B_pad = ((B + 7) // 8) * 8
    if B_pad != B:
        batch = jnp.pad(batch, ((0, 0), (0, B_pad - B), (0, 0)))
    x2d = batch.reshape(T * B_pad, H).astype(w_dtype)

    kernel = functools.partial(_lstm_decoder_kernel, T=T, B=B_pad, L=L, F=F)

    args = (x2d, wih_s, whh_s, bias_s, w_heads, b_heads)
    # Explicit VMEM budget: everything is single-buffered (no pipeline), plus the two
    # f32 scratch slabs and the output; generous 2x factor for compiler temporaries.
    arg_bytes = sum(int(a.size) * a.dtype.itemsize for a in args)
    out_bytes = T * B_pad * P * 4
    scratch_bytes = T * B_pad * (4 * L + L) * 4
    vmem_limit = int(min(max(2 * (arg_bytes + out_bytes + scratch_bytes) + (4 << 20),
                             16 << 20), 64 << 20))

    # Single gridless invocation: memory_space=VMEM BlockSpecs keep every operand and
    # the output single-buffered in VMEM (no double-buffer / prefetch machinery).
    out = pl.pallas_call(
        kernel,
        out_shape=jax.ShapeDtypeStruct((T * B_pad, P), jnp.float32),
        in_specs=[pl.BlockSpec(memory_space=pltpu.MemorySpace.VMEM) for _ in range(6)],
        out_specs=pl.BlockSpec(memory_space=pltpu.MemorySpace.VMEM),
        scratch_shapes=[
            pltpu.VMEM((T * B_pad, 4 * L), jnp.float32),   # hoisted gx slab
            pltpu.VMEM((T * B_pad, L), jnp.float32),       # per-step h slab
        ],
        compiler_params=pltpu.CompilerParams(vmem_limit_bytes=vmem_limit),
    )(*args)
    # TODO(synk): for production T*B large enough to stress v7x's 64 MiB VMEM, tile
    # the input projection + head matmul over T chunks with pltpu.emit_pipeline while
    # keeping h/c and whh resident.

    out3 = out.reshape(T, B_pad, P)
    z_mean = out3[:, :B, :F]
    z_logvar = out3[:, :B, F:2 * F]
    return z_mean, z_logvar


def lstm_decoder_reference(batch, params):
    """Pure-JAX reference (mirrors PyTorch nn.LSTM + heads) for verification."""
    wih_t, whh_t, bias = params["wih_t"], params["whh_t"], params["bias"]
    wm_t, bm, ws_t, bs = params["wm_t"], params["bm"], params["ws_t"], params["bs"]
    T, B, H = batch.shape
    L = whh_t.shape[0]

    def step(carry, x_t):
        h, c = carry
        gates = x_t @ wih_t + h @ whh_t + bias[0]
        i = jax.nn.sigmoid(gates[:, 0 * L:1 * L])
        f = jax.nn.sigmoid(gates[:, 1 * L:2 * L])
        g = jnp.tanh(gates[:, 2 * L:3 * L])
        o = jax.nn.sigmoid(gates[:, 3 * L:4 * L])
        c = f * c + i * g
        h = o * jnp.tanh(c)
        return (h, c), h

    h0 = jnp.zeros((B, L), jnp.float32)
    c0 = jnp.zeros((B, L), jnp.float32)
    _, hs = lax.scan(step, (h0, c0), batch)         # (T, B, L)
    sp = jax.nn.softplus(hs)
    z_mean = sp @ wm_t + bm[0]
    z_logvar = jnp.tanh(sp @ ws_t + bs[0])
    return z_mean, z_logvar


def make_params(key, n_features, lstm_dim, hidden_size):
    """Deterministic synthetic parameters with the same shapes as the PyTorch module."""
    ks = jax.random.split(key, 8)
    scale_lstm = 1.0 / jnp.sqrt(lstm_dim)
    u = lambda k, shape, s: jax.random.uniform(k, shape, jnp.float32, -s, s)

    # nn.LSTM parameters (single layer): weight_ih (4L, H), weight_hh (4L, L), b_ih, b_hh (4L,)
    w_ih = u(ks[0], (4 * lstm_dim, hidden_size), scale_lstm)
    w_hh = u(ks[1], (4 * lstm_dim, lstm_dim), scale_lstm)
    b_ih = u(ks[2], (4 * lstm_dim,), scale_lstm)
    b_hh = u(ks[3], (4 * lstm_dim,), scale_lstm)

    # nn.Linear heads: weight (F, L), bias (F,)
    scale_lin = 1.0 / jnp.sqrt(lstm_dim)
    w_mean = u(ks[4], (n_features, lstm_dim), scale_lin)
    b_mean = u(ks[5], (n_features,), scale_lin)
    w_sigma = u(ks[6], (n_features, lstm_dim), scale_lin)
    b_sigma = u(ks[7], (n_features,), scale_lin)

    return {
        "wih_t": w_ih.T,                              # (H, 4L)
        "whh_t": w_hh.T,                              # (L, 4L)
        "bias": (b_ih + b_hh)[None, :],               # (1, 4L)
        "wm_t": w_mean.T,                             # (L, F)
        "bm": b_mean[None, :],                        # (1, F)
        "ws_t": w_sigma.T,                            # (L, F)
        "bs": b_sigma[None, :],                       # (1, F)
    }


if __name__ == "__main__":
    # Small shapes consistent with the module's forward:
    # batch input [seq_len=8, batch=4, hidden_size=32], lstm_dim=32, n_features=8
    T, B = 8, 4
    n_features, lstm_dim, hidden_size = 8, 32, 32

    key = jax.random.PRNGKey(0)
    k_x, k_p = jax.random.split(key)
    x = jax.random.normal(k_x, (T, B, hidden_size), jnp.float32)
    params = make_params(k_p, n_features, lstm_dim, hidden_size)

    z_mean, z_logvar = jax.block_until_ready(lstm_decoder_forward(x, params))

    # verify against pure-JAX reference (kernel uses 2*sigmoid(2x)-1 for tanh(g),
    # so allow a slightly looser-than-1e-5 tolerance for the rounding difference)
    ref_mean, ref_logvar = lstm_decoder_reference(x, params)
    assert jnp.allclose(z_mean, ref_mean, atol=2e-5, rtol=2e-5)
    assert jnp.allclose(z_logvar, ref_logvar, atol=2e-5, rtol=2e-5)

    print("KERNEL_OK")
</pallas_src>

<mosaic_0001>
module attributes {stable_mosaic.version = 11 : i64} {
  func.func @_lstm_decoder_kernel(%arg0: memref<64x32xf32, #tpu.memory_space<vmem>>, %arg1: memref<32x128xf32, #tpu.memory_space<vmem>>, %arg2: memref<32x128xf32, #tpu.memory_space<vmem>>, %arg3: memref<1x128xf32, #tpu.memory_space<vmem>>, %arg4: memref<32x128xf32, #tpu.memory_space<vmem>>, %arg5: memref<1x128xf32, #tpu.memory_space<vmem>>, %arg6: memref<64x128xf32, #tpu.memory_space<vmem>>, %arg7: memref<64x128xf32, #tpu.memory_space<vmem>>, %arg8: memref<64x32xf32, #tpu.memory_space<vmem>>) attributes {dimension_semantics = [], scalar_prefetch = 0 : i64, scratch_operands = 2 : i64, tpu.core_type = #tpu.core_type<tc>} {
    %c0 = arith.constant 0 : index
    %c0_0 = arith.constant 0 : index
    %0 = vector.load %arg0[%c0, %c0_0] : memref<64x32xf32, #tpu.memory_space<vmem>>, vector<64x32xf32>
    %c0_1 = arith.constant 0 : index
    %c0_2 = arith.constant 0 : index
    %1 = vector.load %arg1[%c0_1, %c0_2] : memref<32x128xf32, #tpu.memory_space<vmem>>, vector<32x128xf32>
    %cst = arith.constant dense<0.000000e+00> : vector<64x128xf32>
    %2 = tpu.matmul %0, %1, %cst {dimension_numbers = #tpu.dot_dimension_numbers<[1], [0], [0], [1], [0, 0, 1, 1], [], []>} : vector<64x32xf32>, vector<32x128xf32>, vector<64x128xf32> -> vector<64x128xf32>
    %c0_3 = arith.constant 0 : index
    %c0_4 = arith.constant 0 : index
    %3 = vector.load %arg3[%c0_3, %c0_4] : memref<1x128xf32, #tpu.memory_space<vmem>>, vector<1x128xf32>
    %4 = vector.broadcast %3 : vector<1x128xf32> to vector<64x128xf32>
    %5 = arith.addf %2, %4 : vector<64x128xf32>
    %c0_5 = arith.constant 0 : index
    %c0_6 = arith.constant 0 : index
    %6 = vector.load %arg7[%c0_5, %c0_6] : memref<64x128xf32, #tpu.memory_space<vmem>>, vector<64x128xf32>
    tpu.vector_store %arg7[%c0_5, %c0_6], %5 {strides = array<i32>} : memref<64x128xf32, #tpu.memory_space<vmem>>, vector<64x128xf32>,
    %c0_7 = arith.constant 0 : index
    %c0_8 = arith.constant 0 : index
    %7 = vector.load %arg2[%c0_7, %c0_8] : memref<32x128xf32, #tpu.memory_space<vmem>>, vector<32x128xf32>
    %cst_9 = arith.constant 0.000000e+00 : f32
    %8 = vector.broadcast %cst_9 : f32 to vector<8x32xf32>
    %cst_10 = arith.constant 0.000000e+00 : f32
    %9 = vector.broadcast %cst_10 : f32 to vector<8x32xf32>
    %c0_i32 = arith.constant 0 : i32
    %c8_i32 = arith.constant 8 : i32
    %10 = arith.muli %c0_i32, %c8_i32 : i32
    %11 = tpu.assume_multiple %10, 8 : i32
    %12 = arith.index_cast %11 : i32 to index
    %c0_11 = arith.constant 0 : index
    %13 = vector.load %arg7[%12, %c0_11] : memref<64x128xf32, #tpu.memory_space<vmem>>, vector<8x128xf32>
    %cst_12 = arith.constant dense<0.000000e+00> : vector<8x128xf32>
    %14 = tpu.matmul %8, %7, %cst_12 {dimension_numbers = #tpu.dot_dimension_numbers<[1], [0], [0], [1], [0, 0, 1, 1], [], []>} : vector<8x32xf32>, vector<32x128xf32>, vector<8x128xf32> -> vector<8x128xf32>
    %15 = arith.addf %13, %14 : vector<8x128xf32>
    %16 = arith.negf %15 : vector<8x128xf32>
    %17 = math.exp %16 : vector<8x128xf32>
    %cst_13 = arith.constant 1.000000e+00 : f32
    %18 = vector.broadcast %cst_13 : f32 to vector<8x128xf32>
    %19 = arith.addf %18, %17 : vector<8x128xf32>
    %20 = arith.divf %18, %19 : vector<8x128xf32>
    %21 = vector.extract_strided_slice %20 {offsets = [0, 0], sizes = [8, 32], strides = [1, 1]} : vector<8x128xf32> to vector<8x32xf32>
    %22 = vector.extract_strided_slice %20 {offsets = [0, 32], sizes = [8, 32], strides = [1, 1]} : vector<8x128xf32> to vector<8x32xf32>
    %23 = vector.extract_strided_slice %20 {offsets = [0, 64], sizes = [8, 32], strides = [1, 1]} : vector<8x128xf32> to vector<8x32xf32>
    %cst_14 = arith.constant 2.000000e+00 : f32
    %24 = vector.broadcast %cst_14 : f32 to vector<8x32xf32>
    %25 = arith.mulf %24, %23 : vector<8x32xf32>
    %cst_15 = arith.constant 1.000000e+00 : f32
    %26 = vector.broadcast %cst_15 : f32 to vector<8x32xf32>
    %27 = arith.subf %25, %26 : vector<8x32xf32>
    %28 = vector.extract_strided_slice %20 {offsets = [0, 96], sizes = [8, 32], strides = [1, 1]} : vector<8x128xf32> to vector<8x32xf32>
    %29 = arith.mulf %22, %9 : vector<8x32xf32>
    %30 = arith.mulf %21, %27 : vector<8x32xf32>
    %31 = arith.addf %29, %30 : vector<8x32xf32>
    %32 = math.tanh %31 : vector<8x32xf32>
    %33 = arith.mulf %28, %32 : vector<8x32xf32>
    %34 = arith.index_cast %11 : i32 to index
    %c0_16 = arith.constant 0 : index
    %35 = vector.load %arg8[%34, %c0_16] : memref<64x32xf32, #tpu.memory_space<vmem>>, vector<8x32xf32>
    tpu.vector_store %arg8[%34, %c0_16], %33 {strides = array<i32>} : memref<64x32xf32, #tpu.memory_space<vmem>>, vector<8x32xf32>,
    %c1_i32 = arith.constant 1 : i32
    %c8_i32_17 = arith.constant 8 : i32
    %36 = arith.muli %c1_i32, %c8_i32_17 : i32
    %37 = tpu.assume_multiple %36, 8 : i32
    %38 = arith.index_cast %37 : i32 to index
    %c0_18 = arith.constant 0 : index
    %39 = vector.load %arg7[%38, %c0_18] : memref<64x128xf32, #tpu.memory_space<vmem>>, vector<8x128xf32>
    %cst_19 = arith.constant dense<0.000000e+00> : vector<8x128xf32>
    %40 = tpu.matmul %33, %7, %cst_19 {dimension_numbers = #tpu.dot_dimension_numbers<[1], [0], [0], [1], [0, 0, 1, 1], [], []>} : vector<8x32xf32>, vector<32x128xf32>, vector<8x128xf32> -> vector<8x128xf32>
    %41 = arith.addf %39, %40 : vector<8x128xf32>
    %42 = arith.negf %41 : vector<8x128xf32>
    %43 = math.exp %42 : vector<8x128xf32>
    %cst_20 = arith.constant 1.000000e+00 : f32
    %44 = vector.broadcast %cst_20 : f32 to vector<8x128xf32>
    %45 = arith.addf %44, %43 : vector<8x128xf32>
    %46 = arith.divf %44, %45 : vector<8x128xf32>
    %47 = vector.extract_strided_slice %46 {offsets = [0, 0], sizes = [8, 32], strides = [1, 1]} : vector<8x128xf32> to vector<8x32xf32>
    %48 = vector.extract_strided_slice %46 {offsets = [0, 32], sizes = [8, 32], strides = [1, 1]} : vector<8x128xf32> to vector<8x32xf32>
    %49 = vector.extract_strided_slice %46 {offsets = [0, 64], sizes = [8, 32], strides = [1, 1]} : vector<8x128xf32> to vector<8x32xf32>
    %cst_21 = arith.constant 2.000000e+00 : f32
    %50 = vector.broadcast %cst_21 : f32 to vector<8x32xf32>
    %51 = arith.mulf %50, %49 : vector<8x32xf32>
    %cst_22 = arith.constant 1.000000e+00 : f32
    %52 = vector.broadcast %cst_22 : f32 to vector<8x32xf32>
    %53 = arith.subf %51, %52 : vector<8x32xf32>
    %54 = vector.extract_strided_slice %46 {offsets = [0, 96], sizes = [8, 32], strides = [1, 1]} : vector<8x128xf32> to vector<8x32xf32>
    %55 = arith.mulf %48, %31 : vector<8x32xf32>
    %56 = arith.mulf %47, %53 : vector<8x32xf32>
    %57 = arith.addf %55, %56 : vector<8x32xf32>
    %58 = math.tanh %57 : vector<8x32xf32>
    %59 = arith.mulf %54, %58 : vector<8x32xf32>
    %60 = arith.index_cast %37 : i32 to index
    %c0_23 = arith.constant 0 : index
    %61 = vector.load %arg8[%60, %c0_23] : memref<64x32xf32, #tpu.memory_space<vmem>>, vector<8x32xf32>
    tpu.vector_store %arg8[%60, %c0_23], %59 {strides = array<i32>} : memref<64x32xf32, #tpu.memory_space<vmem>>, vector<8x32xf32>,
    %c2_i32 = arith.constant 2 : i32
    %c8_i32_24 = arith.constant 8 : i32
    %62 = arith.muli %c2_i32, %c8_i32_24 : i32
    %63 = tpu.assume_multiple %62, 8 : i32
    %64 = arith.index_cast %63 : i32 to index
    %c0_25 = arith.constant 0 : index
    %65 = vector.load %arg7[%64, %c0_25] : memref<64x128xf32, #tpu.memory_space<vmem>>, vector<8x128xf32>
    %cst_26 = arith.constant dense<0.000000e+00> : vector<8x128xf32>
    %66 = tpu.matmul %59, %7, %cst_26 {dimension_numbers = #tpu.dot_dimension_numbers<[1], [0], [0], [1], [0, 0, 1, 1], [], []>} : vector<8x32xf32>, vector<32x128xf32>, vector<8x128xf32> -> vector<8x128xf32>
    %67 = arith.addf %65, %66 : vector<8x128xf32>
    %68 = arith.negf %67 : vector<8x128xf32>
    %69 = math.exp %68 : vector<8x128xf32>
    %cst_27 = arith.constant 1.000000e+00 : f32
    %70 = vector.broadcast %cst_27 : f32 to vector<8x128xf32>
    %71 = arith.addf %70, %69 : vector<8x128xf32>
    %72 = arith.divf %70, %71 : vector<8x128xf32>
    %73 = vector.extract_strided_slice %72 {offsets = [0, 0], sizes = [8, 32], strides = [1, 1]} : vector<8x128xf32> to vector<8x32xf32>
    %74 = vector.extract_strided_slice %72 {offsets = [0, 32], sizes = [8, 32], strides = [1, 1]} : vector<8x128xf32> to vector<8x32xf32>
    %75 = vector.extract_strided_slice %72 {offsets = [0, 64], sizes = [8, 32], strides = [1, 1]} : vector<8x128xf32> to vector<8x32xf32>
    %cst_28 = arith.constant 2.000000e+00 : f32
    %76 = vector.broadcast %cst_28 : f32 to vector<8x32xf32>
    %77 = arith.mulf %76, %75 : vector<8x32xf32>
    %cst_29 = arith.constant 1.000000e+00 : f32
    %78 = vector.broadcast %cst_29 : f32 to vector<8x32xf32>
    %79 = arith.subf %77, %78 : vector<8x32xf32>
    %80 = vector.extract_strided_slice %72 {offsets = [0, 96], sizes = [8, 32], strides = [1, 1]} : vector<8x128xf32> to vector<8x32xf32>
    %81 = arith.mulf %74, %57 : vector<8x32xf32>
    %82 = arith.mulf %73, %79 : vector<8x32xf32>
    %83 = arith.addf %81, %82 : vector<8x32xf32>
    %84 = math.tanh %83 : vector<8x32xf32>
    %85 = arith.mulf %80, %84 : vector<8x32xf32>
    %86 = arith.index_cast %63 : i32 to index
    %c0_30 = arith.constant 0 : index
    %87 = vector.load %arg8[%86, %c0_30] : memref<64x32xf32, #tpu.memory_space<vmem>>, vector<8x32xf32>
    tpu.vector_store %arg8[%86, %c0_30], %85 {strides = array<i32>} : memref<64x32xf32, #tpu.memory_space<vmem>>, vector<8x32xf32>,
    %c3_i32 = arith.constant 3 : i32
    %c8_i32_31 = arith.constant 8 : i32
    %88 = arith.muli %c3_i32, %c8_i32_31 : i32
    %89 = tpu.assume_multiple %88, 8 : i32
    %90 = arith.index_cast %89 : i32 to index
    %c0_32 = arith.constant 0 : index
    %91 = vector.load %arg7[%90, %c0_32] : memref<64x128xf32, #tpu.memory_space<vmem>>, vector<8x128xf32>
    %cst_33 = arith.constant dense<0.000000e+00> : vector<8x128xf32>
    %92 = tpu.matmul %85, %7, %cst_33 {dimension_numbers = #tpu.dot_dimension_numbers<[1], [0], [0], [1], [0, 0, 1, 1], [], []>} : vector<8x32xf32>, vector<32x128xf32>, vector<8x128xf32> -> vector<8x128xf32>
    %93 = arith.addf %91, %92 : vector<8x128xf32>
    %94 = arith.negf %93 : vector<8x128xf32>
    %95 = math.exp %94 : vector<8x128xf32>
    %cst_34 = arith.constant 1.000000e+00 : f32
    %96 = vector.broadcast %cst_34 : f32 to vector<8x128xf32>
    %97 = arith.addf %96, %95 : vector<8x128xf32>
    %98 = arith.divf %96, %97 : vector<8x128xf32>
    %99 = vector.extract_strided_slice %98 {offsets = [0, 0], sizes = [8, 32], strides = [1, 1]} : vector<8x128xf32> to vector<8x32xf32>
    %100 = vector.extract_strided_slice %98 {offsets = [0, 32], sizes = [8, 32], strides = [1, 1]} : vector<8x128xf32> to vector<8x32xf32>
    %101 = vector.extract_strided_slice %98 {offsets = [0, 64], sizes = [8, 32], strides = [1, 1]} : vector<8x128xf32> to vector<8x32xf32>
    %cst_35 = arith.constant 2.000000e+00 : f32
    %102 = vector.broadcast %cst_35 : f32 to vector<8x32xf32>
    %103 = arith.mulf %102, %101 : vector<8x32xf32>
    %cst_36 = arith.constant 1.000000e+00 : f32
    %104 = vector.broadcast %cst_36 : f32 to vector<8x32xf32>
    %105 = arith.subf %103, %104 : vector<8x32xf32>
    %106 = vector.extract_strided_slice %98 {offsets = [0, 96], sizes = [8, 32], strides = [1, 1]} : vector<8x128xf32> to vector<8x32xf32>
    %107 = arith.mulf %100, %83 : vector<8x32xf32>
    %108 = arith.mulf %99, %105 : vector<8x32xf32>
    %109 = arith.addf %107, %108 : vector<8x32xf32>
    %110 = math.tanh %109 : vector<8x32xf32>
    %111 = arith.mulf %106, %110 : vector<8x32xf32>
    %112 = arith.index_cast %89 : i32 to index
    %c0_37 = arith.constant 0 : index
    %113 = vector.load %arg8[%112, %c0_37] : memref<64x32xf32, #tpu.memory_space<vmem>>, vector<8x32xf32>
    tpu.vector_store %arg8[%112, %c0_37], %111 {strides = array<i32>} : memref<64x32xf32, #tpu.memory_space<vmem>>, vector<8x32xf32>,
    %c4_i32 = arith.constant 4 : i32
    %c8_i32_38 = arith.constant 8 : i32
    %114 = arith.muli %c4_i32, %c8_i32_38 : i32
    %115 = tpu.assume_multiple %114, 8 : i32
    %116 = arith.index_cast %115 : i32 to index
    %c0_39 = arith.constant 0 : index
    %117 = vector.load %arg7[%116, %c0_39] : memref<64x128xf32, #tpu.memory_space<vmem>>, vector<8x128xf32>
    %cst_40 = arith.constant dense<0.000000e+00> : vector<8x128xf32>
    %118 = tpu.matmul %111, %7, %cst_40 {dimension_numbers = #tpu.dot_dimension_numbers<[1], [0], [0], [1], [0, 0, 1, 1], [], []>} : vector<8x32xf32>, vector<32x128xf32>, vector<8x128xf32> -> vector<8x128xf32>
    %119 = arith.addf %117, %118 : vector<8x128xf32>
    %120 = arith.negf %119 : vector<8x128xf32>
    %121 = math.exp %120 : vector<8x128xf32>
    %cst_41 = arith.constant 1.000000e+00 : f32
    %122 = vector.broadcast %cst_41 : f32 to vector<8x128xf32>
    %123 = arith.addf %122, %121 : vector<8x128xf32>
    %124 = arith.divf %122, %123 : vector<8x128xf32>
    %125 = vector.extract_strided_slice %124 {offsets = [0, 0], sizes = [8, 32], strides = [1, 1]} : vector<8x128xf32> to vector<8x32xf32>
    %126 = vector.extract_strided_slice %124 {offsets = [0, 32], sizes = [8, 32], strides = [1, 1]} : vector<8x128xf32> to vector<8x32xf32>
    %127 = vector.extract_strided_slice %124 {offsets = [0, 64], sizes = [8, 32], strides = [1, 1]} : vector<8x128xf32> to vector<8x32xf32>
    %cst_42 = arith.constant 2.000000e+00 : f32
    %128 = vector.broadcast %cst_42 : f32 to vector<8x32xf32>
    %129 = arith.mulf %128, %127 : vector<8x32xf32>
    %cst_43 = arith.constant 1.000000e+00 : f32
    %130 = vector.broadcast %cst_43 : f32 to vector<8x32xf32>
    %131 = arith.subf %129, %130 : vector<8x32xf32>
    %132 = vector.extract_strided_slice %124 {offsets = [0, 96], sizes = [8, 32], strides = [1, 1]} : vector<8x128xf32> to vector<8x32xf32>
    %133 = arith.mulf %126, %109 : vector<8x32xf32>
    %134 = arith.mulf %125, %131 : vector<8x32xf32>
    %135 = arith.addf %133, %134 : vector<8x32xf32>
    %136 = math.tanh %135 : vector<8x32xf32>
    %137 = arith.mulf %132, %136 : vector<8x32xf32>
    %138 = arith.index_cast %115 : i32 to index
    %c0_44 = arith.constant 0 : index
    %139 = vector.load %arg8[%138, %c0_44] : memref<64x32xf32, #tpu.memory_space<vmem>>, vector<8x32xf32>
    tpu.vector_store %arg8[%138, %c0_44], %137 {strides = array<i32>} : memref<64x32xf32, #tpu.memory_space<vmem>>, vector<8x32xf32>,
    %c5_i32 = arith.constant 5 : i32
    %c8_i32_45 = arith.constant 8 : i32
    %140 = arith.muli %c5_i32, %c8_i32_45 : i32
    %141 = tpu.assume_multiple %140, 8 : i32
    %142 = arith.index_cast %141 : i32 to index
    %c0_46 = arith.constant 0 : index
    %143 = vector.load %arg7[%142, %c0_46] : memref<64x128xf32, #tpu.memory_space<vmem>>, vector<8x128xf32>
    %cst_47 = arith.constant dense<0.000000e+00> : vector<8x128xf32>
    %144 = tpu.matmul %137, %7, %cst_47 {dimension_numbers = #tpu.dot_dimension_numbers<[1], [0], [0], [1], [0, 0, 1, 1], [], []>} : vector<8x32xf32>, vector<32x128xf32>, vector<8x128xf32> -> vector<8x128xf32>
    %145 = arith.addf %143, %144 : vector<8x128xf32>
    %146 = arith.negf %145 : vector<8x128xf32>
    %147 = math.exp %146 : vector<8x128xf32>
    %cst_48 = arith.constant 1.000000e+00 : f32
    %148 = vector.broadcast %cst_48 : f32 to vector<8x128xf32>
    %149 = arith.addf %148, %147 : vector<8x128xf32>
    %150 = arith.divf %148, %149 : vector<8x128xf32>
    %151 = vector.extract_strided_slice %150 {offsets = [0, 0], sizes = [8, 32], strides = [1, 1]} : vector<8x128xf32> to vector<8x32xf32>
    %152 = vector.extract_strided_slice %150 {offsets = [0, 32], sizes = [8, 32], strides = [1, 1]} : vector<8x128xf32> to vector<8x32xf32>
    %153 = vector.extract_strided_slice %150 {offsets = [0, 64], sizes = [8, 32], strides = [1, 1]} : vector<8x128xf32> to vector<8x32xf32>
    %cst_49 = arith.constant 2.000000e+00 : f32
    %154 = vector.broadcast %cst_49 : f32 to vector<8x32xf32>
    %155 = arith.mulf %154, %153 : vector<8x32xf32>
    %cst_50 = arith.constant 1.000000e+00 : f32
    %156 = vector.broadcast %cst_50 : f32 to vector<8x32xf32>
    %157 = arith.subf %155, %156 : vector<8x32xf32>
    %158 = vector.extract_strided_slice %150 {offsets = [0, 96], sizes = [8, 32], strides = [1, 1]} : vector<8x128xf32> to vector<8x32xf32>
    %159 = arith.mulf %152, %135 : vector<8x32xf32>
    %160 = arith.mulf %151, %157 : vector<8x32xf32>
    %161 = arith.addf %159, %160 : vector<8x32xf32>
    %162 = math.tanh %161 : vector<8x32xf32>
    %163 = arith.mulf %158, %162 : vector<8x32xf32>
    %164 = arith.index_cast %141 : i32 to index
    %c0_51 = arith.constant 0 : index
    %165 = vector.load %arg8[%164, %c0_51] : memref<64x32xf32, #tpu.memory_space<vmem>>, vector<8x32xf32>
    tpu.vector_store %arg8[%164, %c0_51], %163 {strides = array<i32>} : memref<64x32xf32, #tpu.memory_space<vmem>>, vector<8x32xf32>,
    %c6_i32 = arith.constant 6 : i32
    %c8_i32_52 = arith.constant 8 : i32
    %166 = arith.muli %c6_i32, %c8_i32_52 : i32
    %167 = tpu.assume_multiple %166, 8 : i32
    %168 = arith.index_cast %167 : i32 to index
    %c0_53 = arith.constant 0 : index
    %169 = vector.load %arg7[%168, %c0_53] : memref<64x128xf32, #tpu.memory_space<vmem>>, vector<8x128xf32>
    %cst_54 = arith.constant dense<0.000000e+00> : vector<8x128xf32>
    %170 = tpu.matmul %163, %7, %cst_54 {dimension_numbers = #tpu.dot_dimension_numbers<[1], [0], [0], [1], [0, 0, 1, 1], [], []>} : vector<8x32xf32>, vector<32x128xf32>, vector<8x128xf32> -> vector<8x128xf32>
    %171 = arith.addf %169, %170 : vector<8x128xf32>
    %172 = arith.negf %171 : vector<8x128xf32>
    %173 = math.exp %172 : vector<8x128xf32>
    %cst_55 = arith.constant 1.000000e+00 : f32
    %174 = vector.broadcast %cst_55 : f32 to vector<8x128xf32>
    %175 = arith.addf %174, %173 : vector<8x128xf32>
    %176 = arith.divf %174, %175 : vector<8x128xf32>
    %177 = vector.extract_strided_slice %176 {offsets = [0, 0], sizes = [8, 32], strides = [1, 1]} : vector<8x128xf32> to vector<8x32xf32>
    %178 = vector.extract_strided_slice %176 {offsets = [0, 32], sizes = [8, 32], strides = [1, 1]} : vector<8x128xf32> to vector<8x32xf32>
    %179 = vector.extract_strided_slice %176 {offsets = [0, 64], sizes = [8, 32], strides = [1, 1]} : vector<8x128xf32> to vector<8x32xf32>
    %cst_56 = arith.constant 2.000000e+00 : f32
    %180 = vector.broadcast %cst_56 : f32 to vector<8x32xf32>
    %181 = arith.mulf %180, %179 : vector<8x32xf32>
    %cst_57 = arith.constant 1.000000e+00 : f32
    %182 = vector.broadcast %cst_57 : f32 to vector<8x32xf32>
    %183 = arith.subf %181, %182 : vector<8x32xf32>
    %184 = vector.extract_strided_slice %176 {offsets = [0, 96], sizes = [8, 32], strides = [1, 1]} : vector<8x128xf32> to vector<8x32xf32>
    %185 = arith.mulf %178, %161 : vector<8x32xf32>
    %186 = arith.mulf %177, %183 : vector<8x32xf32>
    %187 = arith.addf %185, %186 : vector<8x32xf32>
    %188 = math.tanh %187 : vector<8x32xf32>
    %189 = arith.mulf %184, %188 : vector<8x32xf32>
    %190 = arith.index_cast %167 : i32 to index
    %c0_58 = arith.constant 0 : index
    %191 = vector.load %arg8[%190, %c0_58] : memref<64x32xf32, #tpu.memory_space<vmem>>, vector<8x32xf32>
    tpu.vector_store %arg8[%190, %c0_58], %189 {strides = array<i32>} : memref<64x32xf32, #tpu.memory_space<vmem>>, vector<8x32xf32>,
    %c7_i32 = arith.constant 7 : i32
    %c8_i32_59 = arith.constant 8 : i32
    %192 = arith.muli %c7_i32, %c8_i32_59 : i32
    %193 = tpu.assume_multiple %192, 8 : i32
    %194 = arith.index_cast %193 : i32 to index
    %c0_60 = arith.constant 0 : index
    %195 = vector.load %arg7[%194, %c0_60] : memref<64x128xf32, #tpu.memory_space<vmem>>, vector<8x128xf32>
    %cst_61 = arith.constant dense<0.000000e+00> : vector<8x128xf32>
    %196 = tpu.matmul %189, %7, %cst_61 {dimension_numbers = #tpu.dot_dimension_numbers<[1], [0], [0], [1], [0, 0, 1, 1], [], []>} : vector<8x32xf32>, vector<32x128xf32>, vector<8x128xf32> -> vector<8x128xf32>
    %197 = arith.addf %195, %196 : vector<8x128xf32>
    %198 = arith.negf %197 : vector<8x128xf32>
    %199 = math.exp %198 : vector<8x128xf32>
    %cst_62 = arith.constant 1.000000e+00 : f32
    %200 = vector.broadcast %cst_62 : f32 to vector<8x128xf32>
    %201 = arith.addf %200, %199 : vector<8x128xf32>
    %202 = arith.divf %200, %201 : vector<8x128xf32>
    %203 = vector.extract_strided_slice %202 {offsets = [0, 0], sizes = [8, 32], strides = [1, 1]} : vector<8x128xf32> to vector<8x32xf32>
    %204 = vector.extract_strided_slice %202 {offsets = [0, 32], sizes = [8, 32], strides = [1, 1]} : vector<8x128xf32> to vector<8x32xf32>
    %205 = vector.extract_strided_slice %202 {offsets = [0, 64], sizes = [8, 32], strides = [1, 1]} : vector<8x128xf32> to vector<8x32xf32>
    %cst_63 = arith.constant 2.000000e+00 : f32
    %206 = vector.broadcast %cst_63 : f32 to vector<8x32xf32>
    %207 = arith.mulf %206, %205 : vector<8x32xf32>
    %cst_64 = arith.constant 1.000000e+00 : f32
    %208 = vector.broadcast %cst_64 : f32 to vector<8x32xf32>
    %209 = arith.subf %207, %208 : vector<8x32xf32>
    %210 = vector.extract_strided_slice %202 {offsets = [0, 96], sizes = [8, 32], strides = [1, 1]} : vector<8x128xf32> to vector<8x32xf32>
    %211 = arith.mulf %204, %187 : vector<8x32xf32>
    %212 = arith.mulf %203, %209 : vector<8x32xf32>
    %213 = arith.addf %211, %212 : vector<8x32xf32>
    %214 = math.tanh %213 : vector<8x32xf32>
    %215 = arith.mulf %210, %214 : vector<8x32xf32>
    %216 = arith.index_cast %193 : i32 to index
    %c0_65 = arith.constant 0 : index
    %217 = vector.load %arg8[%216, %c0_65] : memref<64x32xf32, #tpu.memory_space<vmem>>, vector<8x32xf32>
    tpu.vector_store %arg8[%216, %c0_65], %215 {strides = array<i32>} : memref<64x32xf32, #tpu.memory_space<vmem>>, vector<8x32xf32>,
    %c8_i32_66 = arith.constant 8 : i32
    %c0_67 = arith.constant 0 : index
    %c0_68 = arith.constant 0 : index
    %218 = vector.load %arg8[%c0_67, %c0_68] : memref<64x32xf32, #tpu.memory_space<vmem>>, vector<64x32xf32>
    %cst_69 = arith.constant 0.000000e+00 : f32
    %219 = vector.broadcast %cst_69 : f32 to vector<64x32xf32>
    %220 = arith.maximumf %218, %219 : vector<64x32xf32>
    %221 = math.absf %218 : vector<64x32xf32>
    %cst_70 = arith.constant 0.000000e+00 : f32
    %222 = vector.broadcast %cst_70 : f32 to vector<64x32xf32>
    %223 = arith.subf %222, %221 : vector<64x32xf32>
    %224 = math.exp %223 : vector<64x32xf32>
    %225 = math.log1p %224 : vector<64x32xf32>
    %226 = arith.addf %220, %225 : vector<64x32xf32>
    %c0_71 = arith.constant 0 : index
    %c0_72 = arith.constant 0 : index
    %227 = vector.load %arg4[%c0_71, %c0_72] : memref<32x128xf32, #tpu.memory_space<vmem>>, vector<32x128xf32>
    %cst_73 = arith.constant dense<0.000000e+00> : vector<64x128xf32>
    %228 = tpu.matmul %226, %227, %cst_73 {dimension_numbers = #tpu.dot_dimension_numbers<[1], [0], [0], [1], [0, 0, 1, 1], [], []>} : vector<64x32xf32>, vector<32x128xf32>, vector<64x128xf32> -> vector<64x128xf32>
    %c0_74 = arith.constant 0 : index
    %c0_75 = arith.constant 0 : index
    %229 = vector.load %arg5[%c0_74, %c0_75] : memref<1x128xf32, #tpu.memory_space<vmem>>, vector<1x128xf32>
    %230 = vector.broadcast %229 : vector<1x128xf32> to vector<64x128xf32>
    %231 = arith.addf %228, %230 : vector<64x128xf32>
    %232 = tpu.iota {dimensions = array<i32: 1>} : vector<1x128xi32>
    %c8_i32_76 = arith.constant 8 : i32
    %233 = vector.broadcast %c8_i32_76 : i32 to vector<1x128xi32>
    %234 = arith.cmpi sge, %232, %233 : vector<1x128xi32>
    %c16_i32 = arith.constant 16 : i32
    %235 = vector.broadcast %c16_i32 : i32 to vector<1x128xi32>
    %236 = arith.cmpi slt, %232, %235 : vector<1x128xi32>
    %237 = arith.andi %234, %236 : vector<1x128xi1>
    %238 = math.tanh %231 : vector<64x128xf32>
    %239 = vector.shape_cast %237 : vector<1x128xi1> to vector<1x128xi1>
    %240 = vector.broadcast %239 : vector<1x128xi1> to vector<64x128xi1>
    %241 = arith.select %240, %238, %231 : vector<64x128xi1>, vector<64x128xf32>
    %c0_77 = arith.constant 0 : index
    %c0_78 = arith.constant 0 : index
    %242 = vector.load %arg6[%c0_77, %c0_78] : memref<64x128xf32, #tpu.memory_space<vmem>>, vector<64x128xf32>
    tpu.vector_store %arg6[%c0_77, %c0_78], %241 {strides = array<i32>} : memref<64x128xf32, #tpu.memory_space<vmem>>, vector<64x128xf32>,
    return
  }
}

</mosaic_0001>

<llo_original>
// kernel: tpu_custom_call.1
$region0: #{tpu_custom_call.1}
  #allocation0 [shape = 'u32[]', space=smem, size = 0x4, offset = 0x4, fixed_abs, tag = 'smem constant byte address 0x4 - core index']
  #allocation1 [shape = 'u32[144,128]{1,0:T(1,128)}', space=vmem, size = 0x12000, scoped, tag = 'internal scratch']
  #allocation2 [shape = 'f32[64,128]{1,0:T(8,128)}', space=vmem, size = 0x8000, scoped, tag = 'scratch operand']
  #allocation3 [shape = 'f32[64,32]{1,0:T(8,128)}', space=vmem, size = 0x8000, scoped, tag = 'scratch operand']
  %s0 = inlined_call_operand.vmem [shape: f32[64,32], index: 0, kind: input, shape index: {}]
  %s1 = inlined_call_operand.vmem [shape: f32[32,128], index: 1, kind: input, shape index: {}]
  %s2 = inlined_call_operand.vmem [shape: f32[32,128], index: 2, kind: input, shape index: {}]
  %s3 = inlined_call_operand.vmem [shape: f32[1,128], index: 3, kind: input, shape index: {}]
  %s4 = inlined_call_operand.vmem [shape: f32[32,128], index: 4, kind: input, shape index: {}]
  %s5 = inlined_call_operand.vmem [shape: f32[1,128], index: 5, kind: input, shape index: {}]
  %s6 = inlined_call_operand.hbm [shape: f32[64,128], index: 6, kind: output, shape index: {}]
  %s7 = sld [smem:[#allocation0]]
  $region34: #{tpu_custom_call.1} parent=0
    _
  %s9 = ssub.s32 1, %s7
  %s10 = scalar_select 0, %s9, %s7
  $region1: #{tpu_custom_call.1} parent=0
    #allocation4 [shape = 'u8[32768]{0}', space=vmem, size = 0x8000, scoped, tag = 'output window, operand 0, single buffered']
    #allocation5 [shape = 's32[1]{0}', space=sflag, size = 0x4, scoped, tag = 'scoped memory for tpu_custom_call.1']
    %11 = vsyncpa [#allocation5], 0
    // Predicated region
    $region2: #{tpu_custom_call.1} parent=1 // pred_check
      _
    $region3: #{tpu_custom_call.1} parent=1 // pred_check_branch
      %13 = sbr.rel (0) target = $region5
    $region4: #{tpu_custom_call.1} parent=1 // pred_region
      _
    $region5: #{tpu_custom_call.1} parent=1 // pred_fallthru
      _
    // Predicated region
    $region6: #{tpu_custom_call.1} parent=1 // pred_check
      _
    $region7: #{tpu_custom_call.1} parent=1 // pred_check_branch
      %15 = sbr.rel (0) target = $region9
    $region8: #{tpu_custom_call.1} parent=1 // pred_region
      _
    $region9: #{tpu_custom_call.1} parent=1 // pred_fallthru
      _
    // Predicated region
    $region10: #{tpu_custom_call.1} parent=1 // pred_check
      _
    $region11: #{tpu_custom_call.1} parent=1 // pred_check_branch
      %17 = sbr.rel (0) target = $region13
    $region12: #{tpu_custom_call.1} parent=1 // pred_region
      _
    $region13: #{tpu_custom_call.1} parent=1 // pred_fallthru
      _
    // Predicated region
    $region14: #{tpu_custom_call.1} parent=1 // pred_check
      _
    $region15: #{tpu_custom_call.1} parent=1 // pred_check_branch
      %19 = sbr.rel (0) target = $region17
    $region16: #{tpu_custom_call.1} parent=1 // pred_region
      _
    $region17: #{tpu_custom_call.1} parent=1 // pred_fallthru
      _
    // Predicated region
    $region18: #{tpu_custom_call.1} parent=1 // pred_check
      _
    $region19: #{tpu_custom_call.1} parent=1 // pred_check_branch
      %21 = sbr.rel (0) target = $region21
    $region20: #{tpu_custom_call.1} parent=1 // pred_region
      _
    $region21: #{tpu_custom_call.1} parent=1 // pred_fallthru
      _
    // Predicated region
    $region22: #{tpu_custom_call.1} parent=1 // pred_check
      _
    $region23: #{tpu_custom_call.1} parent=1 // pred_check_branch
      %23 = sbr.rel (0) target = $region25
    $region24: #{tpu_custom_call.1} parent=1 // pred_region
      _
    $region25: #{tpu_custom_call.1} parent=1 // pred_fallthru
      _
    %v24 = vld [vmem:[%s0] sm:$0xff]
    %v25 = vld [vmem:[%s0 + $0x8] sm:$0xff]
    %v26 = vld [vmem:[%s0 + $0x10] sm:$0xff]
    %v27 = vld [vmem:[%s0 + $0x18] sm:$0xff]
    %v28 = vld [vmem:[%s0 + $0x20] sm:$0xff]
    %v29 = vld [vmem:[%s0 + $0x28] sm:$0xff]
    %v30 = vld [vmem:[%s0 + $0x30] sm:$0xff]
    %v31 = vld [vmem:[%s0 + $0x38] sm:$0xff]
    %v32 = vld [vmem:[%s1] sm:$0xff]
    %v33 = vld [vmem:[%s1 + $0x8] sm:$0xff]
    %v34 = vld [vmem:[%s1 + $0x10] sm:$0xff]
    %v35 = vld [vmem:[%s1 + $0x18] sm:$0xff]
    %v36 = vld [vmem:[%s3] sm:$0x1]
    %v38 = vlaneseq
    %v39 = vshrl.u32 %v38, 7
    %v40 = vsub.s32 0, %v39
    %v41 = vrot.slane %v36, %v40
    %vm43 = vcmask 261120
    %v45 = vsel %vm43, %v24, 0
    %v48 = vsel %vm43, %v25, 0
    %v51 = vsel %vm43, %v26, 0
    %v54 = vsel %vm43, %v27, 0
    %v57 = vsel %vm43, %v28, 0
    %v60 = vsel %vm43, %v29, 0
    %v63 = vsel %vm43, %v30, 0
    %v66 = vsel %vm43, %v31, 0
    %68 = vmatprep.subr.mxu0 0.0
    %69 = vmatpush1.msra.mxu0 %v32
    %70 = vmatprep.subr.mxu0 0.0
    %71 = vmatpush1.msra.mxu0 %v33
    %72 = vmatprep.subr.mxu0 0.0
    %73 = vmatpush1.msra.mxu0 %v34
    %74 = vmatprep.subr.mxu0 0.0
    %75 = vmatpush1.msra.mxu0 %v35
    %76 = vmatprep.subr.mxu0 0.0
    %77 = vmatpush1.msra.mxu0 0.0
    %78 = vmatprep.subr.mxu0 0.0
    %79 = vmatpush1.msra.mxu0 0.0
    %80 = vmatprep.subr.mxu0 0.0
    %81 = vmatpush1.msra.mxu0 0.0
    %82 = vmatprep.subr.mxu0 0.0
    %83 = vmatpush1.msra.mxu0 0.0
    %84 = vmatprep.subr.mxu0 0.0
    %85 = vmatpush1.msra.mxu0 0.0
    %86 = vmatprep.subr.mxu0 0.0
    %87 = vmatpush1.msra.mxu0 0.0
    %88 = vmatprep.subr.mxu0 0.0
    %89 = vmatpush1.msra.mxu0 0.0
    %90 = vmatprep.subr.mxu0 0.0
    %91 = vmatpush1.msra.mxu0 0.0
    %92 = vmatprep.subr.mxu0 0.0
    %93 = vmatpush1.msra.mxu0 0.0
    %94 = vmatprep.subr.mxu0 0.0
    %95 = vmatpush1.msra.mxu0 0.0
    %96 = vmatprep.subr.mxu0 0.0
    %97 = vmatpush1.msra.mxu0 0.0
    %98 = vmatprep.subr.mxu0 0.0
    %99 = vmatpush1.msra.mxu0 0.0
    %100 = vmatprep.subr.mxu0 0.0
    %101 = vmatpush1.msra.mxu0 0.0
    %102 = vmatprep.subr.mxu0 0.0
    %103 = vmatpush1.msra.mxu0 0.0
    %104 = vmatprep.subr.mxu0 0.0
    %105 = vmatpush1.msra.mxu0 0.0
    %106 = vmatprep.subr.mxu0 0.0
    %107 = vmatpush1.msra.mxu0 0.0
    %108 = vmatprep.subr.mxu0 0.0
    %109 = vmatpush1.msra.mxu0 0.0
    %110 = vmatprep.subr.mxu0 0.0
    %111 = vmatpush1.msra.mxu0 0.0
    %112 = vmatprep.subr.mxu0 0.0
    %113 = vmatpush1.msra.mxu0 0.0
    %114 = vmatprep.subr.mxu0 0.0
    %115 = vmatpush1.msra.mxu0 0.0
    %116 = vmatprep.subr.mxu0 0.0
    %117 = vmatpush1.msra.mxu0 0.0
    %118 = vmatprep.subr.mxu0 0.0
    %119 = vmatpush1.msra.mxu0 0.0
    %120 = vmatprep.subr.mxu0 0.0
    %121 = vmatpush1.msra.mxu0 0.0
    %122 = vmatprep.subr.mxu0 0.0
    %123 = vmatpush1.msra.mxu0 0.0
    %124 = vmatprep.subr.mxu0 0.0
    %125 = vmatpush1.msra.mxu0 0.0
    %126 = vmatprep.subr.mxu0 0.0
    %127 = vmatpush1.msra.mxu0 0.0
    %128 = vmatprep.subr.mxu0 0.0
    %129 = vmatpush1.msra.mxu0 0.0
    %130 = vmatprep.subr.mxu0 0.0
    %131 = vmatpush1.msra.mxu0 0.0
    %132 = vmatprep.mubr.f32.mxu0 0.0
    %133 = vmatmul.mubr.f32.gmra.mrb[0].mxu0 %v45
    %v134 = vpop.f32.mrb[0].mxu0
    %v135 = vadd.f32 %v41, %v134
    %v136 = vpop.f32.mrb[0].mxu0
    %137 = vmatprep.mubr.f32.mxu0 0.0
    %138 = vmatmul.mubr.f32.gmra.mrb[0].mxu0 %v48
    %v139 = vpop.f32.mrb[0].mxu0
    %v140 = vadd.f32 %v41, %v139
    %v141 = vpop.f32.mrb[0].mxu0
    %142 = vmatprep.mubr.f32.mxu0 0.0
    %143 = vmatmul.mubr.f32.gmra.mrb[0].mxu0 %v51
    %v144 = vpop.f32.mrb[0].mxu0
    %v145 = vadd.f32 %v41, %v144
    %v146 = vpop.f32.mrb[0].mxu0
    %147 = vmatprep.mubr.f32.mxu0 0.0
    %148 = vmatmul.mubr.f32.gmra.mrb[0].mxu0 %v54
    %v149 = vpop.f32.mrb[0].mxu0
    %v150 = vadd.f32 %v41, %v149
    %v151 = vpop.f32.mrb[0].mxu0
    %152 = vmatprep.mubr.f32.mxu0 0.0
    %153 = vmatmul.mubr.f32.gmra.mrb[0].mxu0 %v57
    %v154 = vpop.f32.mrb[0].mxu0
    %v155 = vadd.f32 %v41, %v154
    %v156 = vpop.f32.mrb[0].mxu0
    %157 = vmatprep.mubr.f32.mxu0 0.0
    %158 = vmatmul.mubr.f32.gmra.mrb[0].mxu0 %v60
    %v159 = vpop.f32.mrb[0].mxu0
    %v160 = vadd.f32 %v41, %v159
    %v161 = vpop.f32.mrb[0].mxu0
    %162 = vmatprep.mubr.f32.mxu0 0.0
    %163 = vmatmul.mubr.f32.gmra.mrb[0].mxu0 %v63
    %v164 = vpop.f32.mrb[0].mxu0
    %v165 = vadd.f32 %v41, %v164
    %v166 = vpop.f32.mrb[0].mxu0
    %167 = vmatprep.mubr.f32.mxu0 0.0
    %168 = vmatmul.mubr.f32.gmra.mrb[0].mxu0 %v66
    %v169 = vpop.f32.mrb[0].mxu0
    %v170 = vadd.f32 %v41, %v169
    %v171 = vpop.f32.mrb[0].mxu0
    %172 = vdwg.mxu0
    %173 = vst [vmem:[#allocation2] sm:$0xff] %v135
    %174 = vst [vmem:[#allocation2 + $0x8] sm:$0xff] %v140
    %175 = vst [vmem:[#allocation2 + $0x10] sm:$0xff] %v145
    %176 = vst [vmem:[#allocation2 + $0x18] sm:$0xff] %v150
    %177 = vst [vmem:[#allocation2 + $0x20] sm:$0xff] %v155
    %178 = vst [vmem:[#allocation2 + $0x28] sm:$0xff] %v160
    %179 = vst [vmem:[#allocation2 + $0x30] sm:$0xff] %v165
    %180 = vst [vmem:[#allocation2 + $0x38] sm:$0xff] %v170
    %v181 = vld [vmem:[%s2] sm:$0xff]
    %v182 = vld [vmem:[%s2 + $0x8] sm:$0xff]
    %v183 = vld [vmem:[%s2 + $0x10] sm:$0xff]
    %v184 = vld [vmem:[%s2 + $0x18] sm:$0xff]
    %v185 = vld [vmem:[#allocation2] sm:$0xff]
    %v187 = vsel %vm43, 0.0, 0
    %189 = vmatprep.subr.mxu0 0.0
    %190 = vmatpush1.msra.mxu0 %v181
    %191 = vmatprep.subr.mxu0 0.0
    %192 = vmatpush1.msra.mxu0 %v182
    %193 = vmatprep.subr.mxu0 0.0
    %194 = vmatpush1.msra.mxu0 %v183
    %195 = vmatprep.subr.mxu0 0.0
    %196 = vmatpush1.msra.mxu0 %v184
    %197 = vmatprep.subr.mxu0 0.0
    %198 = vmatpush1.msra.mxu0 0.0
    %199 = vmatprep.subr.mxu0 0.0
    %200 = vmatpush1.msra.mxu0 0.0
    %201 = vmatprep.subr.mxu0 0.0
    %202 = vmatpush1.msra.mxu0 0.0
    %203 = vmatprep.subr.mxu0 0.0
    %204 = vmatpush1.msra.mxu0 0.0
    %205 = vmatprep.subr.mxu0 0.0
    %206 = vmatpush1.msra.mxu0 0.0
    %207 = vmatprep.subr.mxu0 0.0
    %208 = vmatpush1.msra.mxu0 0.0
    %209 = vmatprep.subr.mxu0 0.0
    %210 = vmatpush1.msra.mxu0 0.0
    %211 = vmatprep.subr.mxu0 0.0
    %212 = vmatpush1.msra.mxu0 0.0
    %213 = vmatprep.subr.mxu0 0.0
    %214 = vmatpush1.msra.mxu0 0.0
    %215 = vmatprep.subr.mxu0 0.0
    %216 = vmatpush1.msra.mxu0 0.0
    %217 = vmatprep.subr.mxu0 0.0
    %218 = vmatpush1.msra.mxu0 0.0
    %219 = vmatprep.subr.mxu0 0.0
    %220 = vmatpush1.msra.mxu0 0.0
    %221 = vmatprep.subr.mxu0 0.0
    %222 = vmatpush1.msra.mxu0 0.0
    %223 = vmatprep.subr.mxu0 0.0
    %224 = vmatpush1.msra.mxu0 0.0
    %225 = vmatprep.subr.mxu0 0.0
    %226 = vmatpush1.msra.mxu0 0.0
    %227 = vmatprep.subr.mxu0 0.0
    %228 = vmatpush1.msra.mxu0 0.0
    %229 = vmatprep.subr.mxu0 0.0
    %230 = vmatpush1.msra.mxu0 0.0
    %231 = vmatprep.subr.mxu0 0.0
    %232 = vmatpush1.msra.mxu0 0.0
    %233 = vmatprep.subr.mxu0 0.0
    %234 = vmatpush1.msra.mxu0 0.0
    %235 = vmatprep.subr.mxu0 0.0
    %236 = vmatpush1.msra.mxu0 0.0
    %237 = vmatprep.subr.mxu0 0.0
    %238 = vmatpush1.msra.mxu0 0.0
    %239 = vmatprep.subr.mxu0 0.0
    %240 = vmatpush1.msra.mxu0 0.0
    %241 = vmatprep.subr.mxu0 0.0
    %242 = vmatpush1.msra.mxu0 0.0
    %243 = vmatprep.subr.mxu0 0.0
    %244 = vmatpush1.msra.mxu0 0.0
    %245 = vmatprep.subr.mxu0 0.0
    %246 = vmatpush1.msra.mxu0 0.0
    %247 = vmatprep.subr.mxu0 0.0
    %248 = vmatpush1.msra.mxu0 0.0
    %249 = vmatprep.subr.mxu0 0.0
    %250 = vmatpush1.msra.mxu0 0.0
    %251 = vmatprep.subr.mxu0 0.0
    %252 = vmatpush1.msra.mxu0 0.0
    %253 = vmatprep.mubr.f32.mxu0 0.0
    %254 = vmatmul.mubr.f32.gmra.mrb[0].mxu0 %v187
    %v255 = vpop.f32.mrb[0].mxu0
    %v256 = vadd.f32 0.0, %v255
    %v257 = vpop.f32.mrb[0].mxu0
    %258 = vdwg.mxu0
    %v259 = vadd.f32 %v185, %v256
    %v260 = vxor.u32 %v259, 2147483648
    %v261 = vmul.f32 %v260, 1.442695
    %v262 = vpow.pop %v261
    %v263 = vadd.f32 %v262, 1.0
    %v264 = vrcp.pop %v263
    %v265 = vmul.f32 1.0, %v264
    %v266 = vmul.f32 %v265, 2.0
    %v267 = vsub.f32 %v266, 1.0
    %v268 = vmul.f32 %v265, 0.0
    %270 = vrot.lane.b32.xlu0 %v267, 64
    %v271 = vpop.permute.xlu0 %270
    %v273 = vmul.f32 %v265, %v271
    %275 = vrot.lane.b32.xlu0 %v273, 32
    %v276 = vpop.permute.xlu0 %275
    %v278 = vadd.f32 %v268, %v276
    %v279 = vtanh.pop %v278
    %281 = vrot.lane.b32.xlu0 %v279, 64
    %v282 = vpop.permute.xlu0 %281
    %v284 = vmul.f32 %v265, %v282
    %286 = vrot.lane.b32.xlu0 %v284, 32
    %v287 = vpop.permute.xlu0 %286
    %289 = vst.msk [vmem:[#allocation3] sm:$0xff] %vm43, %v287
    %s290 = scalar_lea.vmem [#allocation2], 8
    %v291 = vld [vmem:[%s290] sm:$0xff]
    %v292 = vsel %vm43, %v287, 0
    %294 = vmatprep.subr.mxu0 0.0
    %295 = vmatpush1.msra.mxu0 %v181
    %296 = vmatprep.subr.mxu0 0.0
    %297 = vmatpush1.msra.mxu0 %v182
    %298 = vmatprep.subr.mxu0 0.0
    %299 = vmatpush1.msra.mxu0 %v183
    %300 = vmatprep.subr.mxu0 0.0
    %301 = vmatpush1.msra.mxu0 %v184
    %302 = vmatprep.subr.mxu0 0.0
    %303 = vmatpush1.msra.mxu0 0.0
    %304 = vmatprep.subr.mxu0 0.0
    %305 = vmatpush1.msra.mxu0 0.0
    %306 = vmatprep.subr.mxu0 0.0
    %307 = vmatpush1.msra.mxu0 0.0
    %308 = vmatprep.subr.mxu0 0.0
    %309 = vmatpush1.msra.mxu0 0.0
    %310 = vmatprep.subr.mxu0 0.0
    %311 = vmatpush1.msra.mxu0 0.0
    %312 = vmatprep.subr.mxu0 0.0
    %313 = vmatpush1.msra.mxu0 0.0
    %314 = vmatprep.subr.mxu0 0.0
    %315 = vmatpush1.msra.mxu0 0.0
    %316 = vmatprep.subr.mxu0 0.0
    %317 = vmatpush1.msra.mxu0 0.0
    %318 = vmatprep.subr.mxu0 0.0
    %319 = vmatpush1.msra.mxu0 0.0
    %320 = vmatprep.subr.mxu0 0.0
    %321 = vmatpush1.msra.mxu0 0.0
    %322 = vmatprep.subr.mxu0 0.0
    %323 = vmatpush1.msra.mxu0 0.0
    %324 = vmatprep.subr.mxu0 0.0
    %325 = vmatpush1.msra.mxu0 0.0
    %326 = vmatprep.subr.mxu0 0.0
    %327 = vmatpush1.msra.mxu0 0.0
    %328 = vmatprep.subr.mxu0 0.0
    %329 = vmatpush1.msra.mxu0 0.0
    %330 = vmatprep.subr.mxu0 0.0
    %331 = vmatpush1.msra.mxu0 0.0
    %332 = vmatprep.subr.mxu0 0.0
    %333 = vmatpush1.msra.mxu0 0.0
    %334 = vmatprep.subr.mxu0 0.0
    %335 = vmatpush1.msra.mxu0 0.0
    %336 = vmatprep.subr.mxu0 0.0
    %337 = vmatpush1.msra.mxu0 0.0
    %338 = vmatprep.subr.mxu0 0.0
    %339 = vmatpush1.msra.mxu0 0.0
    %340 = vmatprep.subr.mxu0 0.0
    %341 = vmatpush1.msra.mxu0 0.0
    %342 = vmatprep.subr.mxu0 0.0
    %343 = vmatpush1.msra.mxu0 0.0
    %344 = vmatprep.subr.mxu0 0.0
    %345 = vmatpush1.msra.mxu0 0.0
    %346 = vmatprep.subr.mxu0 0.0
    %347 = vmatpush1.msra.mxu0 0.0
    %348 = vmatprep.subr.mxu0 0.0
    %349 = vmatpush1.msra.mxu0 0.0
    %350 = vmatprep.subr.mxu0 0.0
    %351 = vmatpush1.msra.mxu0 0.0
    %352 = vmatprep.subr.mxu0 0.0
    %353 = vmatpush1.msra.mxu0 0.0
    %354 = vmatprep.subr.mxu0 0.0
    %355 = vmatpush1.msra.mxu0 0.0
    %356 = vmatprep.subr.mxu0 0.0
    %357 = vmatpush1.msra.mxu0 0.0
    %358 = vmatprep.mubr.f32.mxu0 0.0
    %359 = vmatmul.mubr.f32.gmra.mrb[0].mxu0 %v292
    %v360 = vpop.f32.mrb[0].mxu0
    %v361 = vadd.f32 0.0, %v360
    %v362 = vpop.f32.mrb[0].mxu0
    %363 = vdwg.mxu0
    %v364 = vadd.f32 %v291, %v361
    %v365 = vxor.u32 %v364, 2147483648
    %v366 = vmul.f32 %v365, 1.442695
    %v367 = vpow.pop %v366
    %v368 = vadd.f32 %v367, 1.0
    %v369 = vrcp.pop %v368
    %v370 = vmul.f32 1.0, %v369
    %v371 = vmul.f32 %v370, 2.0
    %v372 = vsub.f32 %v371, 1.0
    %v373 = vmul.f32 %v370, %v278
    %375 = vrot.lane.b32.xlu0 %v372, 64
    %v376 = vpop.permute.xlu0 %375
    %v378 = vmul.f32 %v370, %v376
    %380 = vrot.lane.b32.xlu0 %v378, 32
    %v381 = vpop.permute.xlu0 %380
    %v383 = vadd.f32 %v373, %v381
    %v384 = vtanh.pop %v383
    %386 = vrot.lane.b32.xlu0 %v384, 64
    %v387 = vpop.permute.xlu0 %386
    %v389 = vmul.f32 %v370, %v387
    %391 = vrot.lane.b32.xlu0 %v389, 32
    %v392 = vpop.permute.xlu0 %391
    %s394 = scalar_lea.vmem [#allocation3], 8
    %395 = vst.msk [vmem:[%s394] sm:$0xff] %vm43, %v392
    %s396 = scalar_lea.vmem [#allocation2], 16
    %v397 = vld [vmem:[%s396] sm:$0xff]
    %v398 = vsel %vm43, %v392, 0
    %400 = vmatprep.subr.mxu0 0.0
    %401 = vmatpush1.msra.mxu0 %v181
    %402 = vmatprep.subr.mxu0 0.0
    %403 = vmatpush1.msra.mxu0 %v182
    %404 = vmatprep.subr.mxu0 0.0
    %405 = vmatpush1.msra.mxu0 %v183
    %406 = vmatprep.subr.mxu0 0.0
    %407 = vmatpush1.msra.mxu0 %v184
    %408 = vmatprep.subr.mxu0 0.0
    %409 = vmatpush1.msra.mxu0 0.0
    %410 = vmatprep.subr.mxu0 0.0
    %411 = vmatpush1.msra.mxu0 0.0
    %412 = vmatprep.subr.mxu0 0.0
    %413 = vmatpush1.msra.mxu0 0.0
    %414 = vmatprep.subr.mxu0 0.0
    %415 = vmatpush1.msra.mxu0 0.0
    %416 = vmatprep.subr.mxu0 0.0
    %417 = vmatpush1.msra.mxu0 0.0
    %418 = vmatprep.subr.mxu0 0.0
    %419 = vmatpush1.msra.mxu0 0.0
    %420 = vmatprep.subr.mxu0 0.0
    %421 = vmatpush1.msra.mxu0 0.0
    %422 = vmatprep.subr.mxu0 0.0
    %423 = vmatpush1.msra.mxu0 0.0
    %424 = vmatprep.subr.mxu0 0.0
    %425 = vmatpush1.msra.mxu0 0.0
    %426 = vmatprep.subr.mxu0 0.0
    %427 = vmatpush1.msra.mxu0 0.0
    %428 = vmatprep.subr.mxu0 0.0
    %429 = vmatpush1.msra.mxu0 0.0
    %430 = vmatprep.subr.mxu0 0.0
    %431 = vmatpush1.msra.mxu0 0.0
    %432 = vmatprep.subr.mxu0 0.0
    %433 = vmatpush1.msra.mxu0 0.0
    %434 = vmatprep.subr.mxu0 0.0
    %435 = vmatpush1.msra.mxu0 0.0
    %436 = vmatprep.subr.mxu0 0.0
    %437 = vmatpush1.msra.mxu0 0.0
    %438 = vmatprep.subr.mxu0 0.0
    %439 = vmatpush1.msra.mxu0 0.0
    %440 = vmatprep.subr.mxu0 0.0
    %441 = vmatpush1.msra.mxu0 0.0
    %442 = vmatprep.subr.mxu0 0.0
    %443 = vmatpush1.msra.mxu0 0.0
    %444 = vmatprep.subr.mxu0 0.0
    %445 = vmatpush1.msra.mxu0 0.0
    %446 = vmatprep.subr.mxu0 0.0
    %447 = vmatpush1.msra.mxu0 0.0
    %448 = vmatprep.subr.mxu0 0.0
    %449 = vmatpush1.msra.mxu0 0.0
    %450 = vmatprep.subr.mxu0 0.0
    %451 = vmatpush1.msra.mxu0 0.0
    %452 = vmatprep.subr.mxu0 0.0
    %453 = vmatpush1.msra.mxu0 0.0
    %454 = vmatprep.subr.mxu0 0.0
    %455 = vmatpush1.msra.mxu0 0.0
    %456 = vmatprep.subr.mxu0 0.0
    %457 = vmatpush1.msra.mxu0 0.0
    %458 = vmatprep.subr.mxu0 0.0
    %459 = vmatpush1.msra.mxu0 0.0
    %460 = vmatprep.subr.mxu0 0.0
    %461 = vmatpush1.msra.mxu0 0.0
    %462 = vmatprep.subr.mxu0 0.0
    %463 = vmatpush1.msra.mxu0 0.0
    %464 = vmatprep.mubr.f32.mxu0 0.0
    %465 = vmatmul.mubr.f32.gmra.mrb[0].mxu0 %v398
    %v466 = vpop.f32.mrb[0].mxu0
    %v467 = vadd.f32 0.0, %v466
    %v468 = vpop.f32.mrb[0].mxu0
    %469 = vdwg.mxu0
    %v470 = vadd.f32 %v397, %v467
    %v471 = vxor.u32 %v470, 2147483648
    %v472 = vmul.f32 %v471, 1.442695
    %v473 = vpow.pop %v472
    %v474 = vadd.f32 %v473, 1.0
    %v475 = vrcp.pop %v474
    %v476 = vmul.f32 1.0, %v475
    %v477 = vmul.f32 %v476, 2.0
    %v478 = vsub.f32 %v477, 1.0
    %v479 = vmul.f32 %v476, %v383
    %481 = vrot.lane.b32.xlu0 %v478, 64
    %v482 = vpop.permute.xlu0 %481
    %v484 = vmul.f32 %v476, %v482
    %486 = vrot.lane.b32.xlu0 %v484, 32
    %v487 = vpop.permute.xlu0 %486
    %v489 = vadd.f32 %v479, %v487
    %v490 = vtanh.pop %v489
    %492 = vrot.lane.b32.xlu0 %v490, 64
    %v493 = vpop.permute.xlu0 %492
    %v495 = vmul.f32 %v476, %v493
    %497 = vrot.lane.b32.xlu0 %v495, 32
    %v498 = vpop.permute.xlu0 %497
    %s500 = scalar_lea.vmem [#allocation3], 16
    %501 = vst.msk [vmem:[%s500] sm:$0xff] %vm43, %v498
    %s502 = scalar_lea.vmem [#allocation2], 24
    %v503 = vld [vmem:[%s502] sm:$0xff]
    %v504 = vsel %vm43, %v498, 0
    %506 = vmatprep.subr.mxu0 0.0
    %507 = vmatpush1.msra.mxu0 %v181
    %508 = vmatprep.subr.mxu0 0.0
    %509 = vmatpush1.msra.mxu0 %v182
    %510 = vmatprep.subr.mxu0 0.0
    %511 = vmatpush1.msra.mxu0 %v183
    %512 = vmatprep.subr.mxu0 0.0
    %513 = vmatpush1.msra.mxu0 %v184
    %514 = vmatprep.subr.mxu0 0.0
    %515 = vmatpush1.msra.mxu0 0.0
    %516 = vmatprep.subr.mxu0 0.0
    %517 = vmatpush1.msra.mxu0 0.0
    %518 = vmatprep.subr.mxu0 0.0
    %519 = vmatpush1.msra.mxu0 0.0
    %520 = vmatprep.subr.mxu0 0.0
    %521 = vmatpush1.msra.mxu0 0.0
    %522 = vmatprep.subr.mxu0 0.0
    %523 = vmatpush1.msra.mxu0 0.0
    %524 = vmatprep.subr.mxu0 0.0
    %525 = vmatpush1.msra.mxu0 0.0
    %526 = vmatprep.subr.mxu0 0.0
    %527 = vmatpush1.msra.mxu0 0.0
    %528 = vmatprep.subr.mxu0 0.0
    %529 = vmatpush1.msra.mxu0 0.0
    %530 = vmatprep.subr.mxu0 0.0
    %531 = vmatpush1.msra.mxu0 0.0
    %532 = vmatprep.subr.mxu0 0.0
    %533 = vmatpush1.msra.mxu0 0.0
    %534 = vmatprep.subr.mxu0 0.0
    %535 = vmatpush1.msra.mxu0 0.0
    %536 = vmatprep.subr.mxu0 0.0
    %537 = vmatpush1.msra.mxu0 0.0
    %538 = vmatprep.subr.mxu0 0.0
    %539 = vmatpush1.msra.mxu0 0.0
    %540 = vmatprep.subr.mxu0 0.0
    %541 = vmatpush1.msra.mxu0 0.0
    %542 = vmatprep.subr.mxu0 0.0
    %543 = vmatpush1.msra.mxu0 0.0
    %544 = vmatprep.subr.mxu0 0.0
    %545 = vmatpush1.msra.mxu0 0.0
    %546 = vmatprep.subr.mxu0 0.0
    %547 = vmatpush1.msra.mxu0 0.0
    %548 = vmatprep.subr.mxu0 0.0
    %549 = vmatpush1.msra.mxu0 0.0
    %550 = vmatprep.subr.mxu0 0.0
    %551 = vmatpush1.msra.mxu0 0.0
    %552 = vmatprep.subr.mxu0 0.0
    %553 = vmatpush1.msra.mxu0 0.0
    %554 = vmatprep.subr.mxu0 0.0
    %555 = vmatpush1.msra.mxu0 0.0
    %556 = vmatprep.subr.mxu0 0.0
    %557 = vmatpush1.msra.mxu0 0.0
    %558 = vmatprep.subr.mxu0 0.0
    %559 = vmatpush1.msra.mxu0 0.0
    %560 = vmatprep.subr.mxu0 0.0
    %561 = vmatpush1.msra.mxu0 0.0
    %562 = vmatprep.subr.mxu0 0.0
    %563 = vmatpush1.msra.mxu0 0.0
    %564 = vmatprep.subr.mxu0 0.0
    %565 = vmatpush1.msra.mxu0 0.0
    %566 = vmatprep.subr.mxu0 0.0
    %567 = vmatpush1.msra.mxu0 0.0
    %568 = vmatprep.subr.mxu0 0.0
    %569 = vmatpush1.msra.mxu0 0.0
    %570 = vmatprep.mubr.f32.mxu0 0.0
    %571 = vmatmul.mubr.f32.gmra.mrb[0].mxu0 %v504
    %v572 = vpop.f32.mrb[0].mxu0
    %v573 = vadd.f32 0.0, %v572
    %v574 = vpop.f32.mrb[0].mxu0
    %575 = vdwg.mxu0
    %v576 = vadd.f32 %v503, %v573
    %v577 = vxor.u32 %v576, 2147483648
    %v578 = vmul.f32 %v577, 1.442695
    %v579 = vpow.pop %v578
    %v580 = vadd.f32 %v579, 1.0
    %v581 = vrcp.pop %v580
    %v582 = vmul.f32 1.0, %v581
    %v583 = vmul.f32 %v582, 2.0
    %v584 = vsub.f32 %v583, 1.0
    %v585 = vmul.f32 %v582, %v489
    %587 = vrot.lane.b32.xlu0 %v584, 64
    %v588 = vpop.permute.xlu0 %587
    %v590 = vmul.f32 %v582, %v588
    %592 = vrot.lane.b32.xlu0 %v590, 32
    %v593 = vpop.permute.xlu0 %592
    %v595 = vadd.f32 %v585, %v593
    %v596 = vtanh.pop %v595
    %598 = vrot.lane.b32.xlu0 %v596, 64
    %v599 = vpop.permute.xlu0 %598
    %v601 = vmul.f32 %v582, %v599
    %603 = vrot.lane.b32.xlu0 %v601, 32
    %v604 = vpop.permute.xlu0 %603
    %s606 = scalar_lea.vmem [#allocation3], 24
    %607 = vst.msk [vmem:[%s606] sm:$0xff] %vm43, %v604
    %s608 = scalar_lea.vmem [#allocation2], 32
    %v609 = vld [vmem:[%s608] sm:$0xff]
    %v610 = vsel %vm43, %v604, 0
    %612 = vmatprep.subr.mxu0 0.0
    %613 = vmatpush1.msra.mxu0 %v181
    %614 = vmatprep.subr.mxu0 0.0
    %615 = vmatpush1.msra.mxu0 %v182
    %616 = vmatprep.subr.mxu0 0.0
    %617 = vmatpush1.msra.mxu0 %v183
    %618 = vmatprep.subr.mxu0 0.0
    %619 = vmatpush1.msra.mxu0 %v184
    %620 = vmatprep.subr.mxu0 0.0
    %621 = vmatpush1.msra.mxu0 0.0
    %622 = vmatprep.subr.mxu0 0.0
    %623 = vmatpush1.msra.mxu0 0.0
    %624 = vmatprep.subr.mxu0 0.0
    %625 = vmatpush1.msra.mxu0 0.0
    %626 = vmatprep.subr.mxu0 0.0
    %627 = vmatpush1.msra.mxu0 0.0
    %628 = vmatprep.subr.mxu0 0.0
    %629 = vmatpush1.msra.mxu0 0.0
    %630 = vmatprep.subr.mxu0 0.0
    %631 = vmatpush1.msra.mxu0 0.0
    %632 = vmatprep.subr.mxu0 0.0
    %633 = vmatpush1.msra.mxu0 0.0
    %634 = vmatprep.subr.mxu0 0.0
    %635 = vmatpush1.msra.mxu0 0.0
    %636 = vmatprep.subr.mxu0 0.0
    %637 = vmatpush1.msra.mxu0 0.0
    %638 = vmatprep.subr.mxu0 0.0
    %639 = vmatpush1.msra.mxu0 0.0
    %640 = vmatprep.subr.mxu0 0.0
    %641 = vmatpush1.msra.mxu0 0.0
    %642 = vmatprep.subr.mxu0 0.0
    %643 = vmatpush1.msra.mxu0 0.0
    %644 = vmatprep.subr.mxu0 0.0
    %645 = vmatpush1.msra.mxu0 0.0
    %646 = vmatprep.subr.mxu0 0.0
    %647 = vmatpush1.msra.mxu0 0.0
    %648 = vmatprep.subr.mxu0 0.0
    %649 = vmatpush1.msra.mxu0 0.0
    %650 = vmatprep.subr.mxu0 0.0
    %651 = vmatpush1.msra.mxu0 0.0
    %652 = vmatprep.subr.mxu0 0.0
    %653 = vmatpush1.msra.mxu0 0.0
    %654 = vmatprep.subr.mxu0 0.0
    %655 = vmatpush1.msra.mxu0 0.0
    %656 = vmatprep.subr.mxu0 0.0
    %657 = vmatpush1.msra.mxu0 0.0
    %658 = vmatprep.subr.mxu0 0.0
    %659 = vmatpush1.msra.mxu0 0.0
    %660 = vmatprep.subr.mxu0 0.0
    %661 = vmatpush1.msra.mxu0 0.0
    %662 = vmatprep.subr.mxu0 0.0
    %663 = vmatpush1.msra.mxu0 0.0
    %664 = vmatprep.subr.mxu0 0.0
    %665 = vmatpush1.msra.mxu0 0.0
    %666 = vmatprep.subr.mxu0 0.0
    %667 = vmatpush1.msra.mxu0 0.0
    %668 = vmatprep.subr.mxu0 0.0
    %669 = vmatpush1.msra.mxu0 0.0
    %670 = vmatprep.subr.mxu0 0.0
    %671 = vmatpush1.msra.mxu0 0.0
    %672 = vmatprep.subr.mxu0 0.0
    %673 = vmatpush1.msra.mxu0 0.0
    %674 = vmatprep.subr.mxu0 0.0
    %675 = vmatpush1.msra.mxu0 0.0
    %676 = vmatprep.mubr.f32.mxu0 0.0
    %677 = vmatmul.mubr.f32.gmra.mrb[0].mxu0 %v610
    %v678 = vpop.f32.mrb[0].mxu0
    %v679 = vadd.f32 0.0, %v678
    %v680 = vpop.f32.mrb[0].mxu0
    %681 = vdwg.mxu0
    %v682 = vadd.f32 %v609, %v679
    %v683 = vxor.u32 %v682, 2147483648
    %v684 = vmul.f32 %v683, 1.442695
    %v685 = vpow.pop %v684
    %v686 = vadd.f32 %v685, 1.0
    %v687 = vrcp.pop %v686
    %v688 = vmul.f32 1.0, %v687
    %v689 = vmul.f32 %v688, 2.0
    %v690 = vsub.f32 %v689, 1.0
    %v691 = vmul.f32 %v688, %v595
    %693 = vrot.lane.b32.xlu0 %v690, 64
    %v694 = vpop.permute.xlu0 %693
    %v696 = vmul.f32 %v688, %v694
    %698 = vrot.lane.b32.xlu0 %v696, 32
    %v699 = vpop.permute.xlu0 %698
    %v701 = vadd.f32 %v691, %v699
    %v702 = vtanh.pop %v701
    %704 = vrot.lane.b32.xlu0 %v702, 64
    %v705 = vpop.permute.xlu0 %704
    %v707 = vmul.f32 %v688, %v705
    %709 = vrot.lane.b32.xlu0 %v707, 32
    %v710 = vpop.permute.xlu0 %709
    %s712 = scalar_lea.vmem [#allocation3], 32
    %713 = vst.msk [vmem:[%s712] sm:$0xff] %vm43, %v710
    %s714 = scalar_lea.vmem [#allocation2], 40
    %v715 = vld [vmem:[%s714] sm:$0xff]
    %v716 = vsel %vm43, %v710, 0
    %718 = vmatprep.subr.mxu0 0.0
    %719 = vmatpush1.msra.mxu0 %v181
    %720 = vmatprep.subr.mxu0 0.0
    %721 = vmatpush1.msra.mxu0 %v182
    %722 = vmatprep.subr.mxu0 0.0
    %723 = vmatpush1.msra.mxu0 %v183
    %724 = vmatprep.subr.mxu0 0.0
    %725 = vmatpush1.msra.mxu0 %v184
    %726 = vmatprep.subr.mxu0 0.0
    %727 = vmatpush1.msra.mxu0 0.0
    %728 = vmatprep.subr.mxu0 0.0
    %729 = vmatpush1.msra.mxu0 0.0
    %730 = vmatprep.subr.mxu0 0.0
    %731 = vmatpush1.msra.mxu0 0.0
    %732 = vmatprep.subr.mxu0 0.0
    %733 = vmatpush1.msra.mxu0 0.0
    %734 = vmatprep.subr.mxu0 0.0
    %735 = vmatpush1.msra.mxu0 0.0
    %736 = vmatprep.subr.mxu0 0.0
    %737 = vmatpush1.msra.mxu0 0.0
    %738 = vmatprep.subr.mxu0 0.0
    %739 = vmatpush1.msra.mxu0 0.0
    %740 = vmatprep.subr.mxu0 0.0
    %741 = vmatpush1.msra.mxu0 0.0
    %742 = vmatprep.subr.mxu0 0.0
    %743 = vmatpush1.msra.mxu0 0.0
    %744 = vmatprep.subr.mxu0 0.0
    %745 = vmatpush1.msra.mxu0 0.0
    %746 = vmatprep.subr.mxu0 0.0
    %747 = vmatpush1.msra.mxu0 0.0
    %748 = vmatprep.subr.mxu0 0.0
    %749 = vmatpush1.msra.mxu0 0.0
    %750 = vmatprep.subr.mxu0 0.0
    %751 = vmatpush1.msra.mxu0 0.0
    %752 = vmatprep.subr.mxu0 0.0
    %753 = vmatpush1.msra.mxu0 0.0
    %754 = vmatprep.subr.mxu0 0.0
    %755 = vmatpush1.msra.mxu0 0.0
    %756 = vmatprep.subr.mxu0 0.0
    %757 = vmatpush1.msra.mxu0 0.0
    %758 = vmatprep.subr.mxu0 0.0
    %759 = vmatpush1.msra.mxu0 0.0
    %760 = vmatprep.subr.mxu0 0.0
    %761 = vmatpush1.msra.mxu0 0.0
    %762 = vmatprep.subr.mxu0 0.0
    %763 = vmatpush1.msra.mxu0 0.0
    %764 = vmatprep.subr.mxu0 0.0
    %765 = vmatpush1.msra.mxu0 0.0
    %766 = vmatprep.subr.mxu0 0.0
    %767 = vmatpush1.msra.mxu0 0.0
    %768 = vmatprep.subr.mxu0 0.0
    %769 = vmatpush1.msra.mxu0 0.0
    %770 = vmatprep.subr.mxu0 0.0
    %771 = vmatpush1.msra.mxu0 0.0
    %772 = vmatprep.subr.mxu0 0.0
    %773 = vmatpush1.msra.mxu0 0.0
    %774 = vmatprep.subr.mxu0 0.0
    %775 = vmatpush1.msra.mxu0 0.0
    %776 = vmatprep.subr.mxu0 0.0
    %777 = vmatpush1.msra.mxu0 0.0
    %778 = vmatprep.subr.mxu0 0.0
    %779 = vmatpush1.msra.mxu0 0.0
    %780 = vmatprep.subr.mxu0 0.0
    %781 = vmatpush1.msra.mxu0 0.0
    %782 = vmatprep.mubr.f32.mxu0 0.0
    %783 = vmatmul.mubr.f32.gmra.mrb[0].mxu0 %v716
    %v784 = vpop.f32.mrb[0].mxu0
    %v785 = vadd.f32 0.0, %v784
    %v786 = vpop.f32.mrb[0].mxu0
    %787 = vdwg.mxu0
    %v788 = vadd.f32 %v715, %v785
    %v789 = vxor.u32 %v788, 2147483648
    %v790 = vmul.f32 %v789, 1.442695
    %v791 = vpow.pop %v790
    %v792 = vadd.f32 %v791, 1.0
    %v793 = vrcp.pop %v792
    %v794 = vmul.f32 1.0, %v793
    %v795 = vmul.f32 %v794, 2.0
    %v796 = vsub.f32 %v795, 1.0
    %v797 = vmul.f32 %v794, %v701
    %799 = vrot.lane.b32.xlu0 %v796, 64
    %v800 = vpop.permute.xlu0 %799
    %v802 = vmul.f32 %v794, %v800
    %804 = vrot.lane.b32.xlu0 %v802, 32
    %v805 = vpop.permute.xlu0 %804
    %v807 = vadd.f32 %v797, %v805
    %v808 = vtanh.pop %v807
    %810 = vrot.lane.b32.xlu0 %v808, 64
    %v811 = vpop.permute.xlu0 %810
    %v813 = vmul.f32 %v794, %v811
    %815 = vrot.lane.b32.xlu0 %v813, 32
    %v816 = vpop.permute.xlu0 %815
    %s818 = scalar_lea.vmem [#allocation3], 40
    %819 = vst.msk [vmem:[%s818] sm:$0xff] %vm43, %v816
    %s820 = scalar_lea.vmem [#allocation2], 48
    %v821 = vld [vmem:[%s820] sm:$0xff]
    %v822 = vsel %vm43, %v816, 0
    %824 = vmatprep.subr.mxu0 0.0
    %825 = vmatpush1.msra.mxu0 %v181
    %826 = vmatprep.subr.mxu0 0.0
    %827 = vmatpush1.msra.mxu0 %v182
    %828 = vmatprep.subr.mxu0 0.0
    %829 = vmatpush1.msra.mxu0 %v183
    %830 = vmatprep.subr.mxu0 0.0
    %831 = vmatpush1.msra.mxu0 %v184
    %832 = vmatprep.subr.mxu0 0.0
    %833 = vmatpush1.msra.mxu0 0.0
    %834 = vmatprep.subr.mxu0 0.0
    %835 = vmatpush1.msra.mxu0 0.0
    %836 = vmatprep.subr.mxu0 0.0
    %837 = vmatpush1.msra.mxu0 0.0
    %838 = vmatprep.subr.mxu0 0.0
    %839 = vmatpush1.msra.mxu0 0.0
    %840 = vmatprep.subr.mxu0 0.0
    %841 = vmatpush1.msra.mxu0 0.0
    %842 = vmatprep.subr.mxu0 0.0
    %843 = vmatpush1.msra.mxu0 0.0
    %844 = vmatprep.subr.mxu0 0.0
    %845 = vmatpush1.msra.mxu0 0.0
    %846 = vmatprep.subr.mxu0 0.0
    %847 = vmatpush1.msra.mxu0 0.0
    %848 = vmatprep.subr.mxu0 0.0
    %849 = vmatpush1.msra.mxu0 0.0
    %850 = vmatprep.subr.mxu0 0.0
    %851 = vmatpush1.msra.mxu0 0.0
    %852 = vmatprep.subr.mxu0 0.0
    %853 = vmatpush1.msra.mxu0 0.0
    %854 = vmatprep.subr.mxu0 0.0
    %855 = vmatpush1.msra.mxu0 0.0
    %856 = vmatprep.subr.mxu0 0.0
    %857 = vmatpush1.msra.mxu0 0.0
    %858 = vmatprep.subr.mxu0 0.0
    %859 = vmatpush1.msra.mxu0 0.0
    %860 = vmatprep.subr.mxu0 0.0
    %861 = vmatpush1.msra.mxu0 0.0
    %862 = vmatprep.subr.mxu0 0.0
    %863 = vmatpush1.msra.mxu0 0.0
    %864 = vmatprep.subr.mxu0 0.0
    %865 = vmatpush1.msra.mxu0 0.0
    %866 = vmatprep.subr.mxu0 0.0
    %867 = vmatpush1.msra.mxu0 0.0
    %868 = vmatprep.subr.mxu0 0.0
    %869 = vmatpush1.msra.mxu0 0.0
    %870 = vmatprep.subr.mxu0 0.0
    %871 = vmatpush1.msra.mxu0 0.0
    %872 = vmatprep.subr.mxu0 0.0
    %873 = vmatpush1.msra.mxu0 0.0
    %874 = vmatprep.subr.mxu0 0.0
    %875 = vmatpush1.msra.mxu0 0.0
    %876 = vmatprep.subr.mxu0 0.0
    %877 = vmatpush1.msra.mxu0 0.0
    %878 = vmatprep.subr.mxu0 0.0
    %879 = vmatpush1.msra.mxu0 0.0
    %880 = vmatprep.subr.mxu0 0.0
    %881 = vmatpush1.msra.mxu0 0.0
    %882 = vmatprep.subr.mxu0 0.0
    %883 = vmatpush1.msra.mxu0 0.0
    %884 = vmatprep.subr.mxu0 0.0
    %885 = vmatpush1.msra.mxu0 0.0
    %886 = vmatprep.subr.mxu0 0.0
    %887 = vmatpush1.msra.mxu0 0.0
    %888 = vmatprep.mubr.f32.mxu0 0.0
    %889 = vmatmul.mubr.f32.gmra.mrb[0].mxu0 %v822
    %v890 = vpop.f32.mrb[0].mxu0
    %v891 = vadd.f32 0.0, %v890
    %v892 = vpop.f32.mrb[0].mxu0
    %893 = vdwg.mxu0
    %v894 = vadd.f32 %v821, %v891
    %v895 = vxor.u32 %v894, 2147483648
    %v896 = vmul.f32 %v895, 1.442695
    %v897 = vpow.pop %v896
    %v898 = vadd.f32 %v897, 1.0
    %v899 = vrcp.pop %v898
    %v900 = vmul.f32 1.0, %v899
    %v901 = vmul.f32 %v900, 2.0
    %v902 = vsub.f32 %v901, 1.0
    %v903 = vmul.f32 %v900, %v807
    %905 = vrot.lane.b32.xlu0 %v902, 64
    %v906 = vpop.permute.xlu0 %905
    %v908 = vmul.f32 %v900, %v906
    %910 = vrot.lane.b32.xlu0 %v908, 32
    %v911 = vpop.permute.xlu0 %910
    %v913 = vadd.f32 %v903, %v911
    %v914 = vtanh.pop %v913
    %916 = vrot.lane.b32.xlu0 %v914, 64
    %v917 = vpop.permute.xlu0 %916
    %v919 = vmul.f32 %v900, %v917
    %921 = vrot.lane.b32.xlu0 %v919, 32
    %v922 = vpop.permute.xlu0 %921
    %s924 = scalar_lea.vmem [#allocation3], 48
    %925 = vst.msk [vmem:[%s924] sm:$0xff] %vm43, %v922
    %s926 = scalar_lea.vmem [#allocation2], 56
    %v927 = vld [vmem:[%s926] sm:$0xff]
    %v928 = vsel %vm43, %v922, 0
    %930 = vmatprep.subr.mxu0 0.0
    %931 = vmatpush1.msra.mxu0 %v181
    %932 = vmatprep.subr.mxu0 0.0
    %933 = vmatpush1.msra.mxu0 %v182
    %934 = vmatprep.subr.mxu0 0.0
    %935 = vmatpush1.msra.mxu0 %v183
    %936 = vmatprep.subr.mxu0 0.0
    %937 = vmatpush1.msra.mxu0 %v184
    %938 = vmatprep.subr.mxu0 0.0
    %939 = vmatpush1.msra.mxu0 0.0
    %940 = vmatprep.subr.mxu0 0.0
    %941 = vmatpush1.msra.mxu0 0.0
    %942 = vmatprep.subr.mxu0 0.0
    %943 = vmatpush1.msra.mxu0 0.0
    %944 = vmatprep.subr.mxu0 0.0
    %945 = vmatpush1.msra.mxu0 0.0
    %946 = vmatprep.subr.mxu0 0.0
    %947 = vmatpush1.msra.mxu0 0.0
    %948 = vmatprep.subr.mxu0 0.0
    %949 = vmatpush1.msra.mxu0 0.0
    %950 = vmatprep.subr.mxu0 0.0
    %951 = vmatpush1.msra.mxu0 0.0
    %952 = vmatprep.subr.mxu0 0.0
    %953 = vmatpush1.msra.mxu0 0.0
    %954 = vmatprep.subr.mxu0 0.0
    %955 = vmatpush1.msra.mxu0 0.0
    %956 = vmatprep.subr.mxu0 0.0
    %957 = vmatpush1.msra.mxu0 0.0
    %958 = vmatprep.subr.mxu0 0.0
    %959 = vmatpush1.msra.mxu0 0.0
    %960 = vmatprep.subr.mxu0 0.0
    %961 = vmatpush1.msra.mxu0 0.0
    %962 = vmatprep.subr.mxu0 0.0
    %963 = vmatpush1.msra.mxu0 0.0
    %964 = vmatprep.subr.mxu0 0.0
    %965 = vmatpush1.msra.mxu0 0.0
    %966 = vmatprep.subr.mxu0 0.0
    %967 = vmatpush1.msra.mxu0 0.0
    %968 = vmatprep.subr.mxu0 0.0
    %969 = vmatpush1.msra.mxu0 0.0
    %970 = vmatprep.subr.mxu0 0.0
    %971 = vmatpush1.msra.mxu0 0.0
    %972 = vmatprep.subr.mxu0 0.0
    %973 = vmatpush1.msra.mxu0 0.0
    %974 = vmatprep.subr.mxu0 0.0
    %975 = vmatpush1.msra.mxu0 0.0
    %976 = vmatprep.subr.mxu0 0.0
    %977 = vmatpush1.msra.mxu0 0.0
    %978 = vmatprep.subr.mxu0 0.0
    %979 = vmatpush1.msra.mxu0 0.0
    %980 = vmatprep.subr.mxu0 0.0
    %981 = vmatpush1.msra.mxu0 0.0
    %982 = vmatprep.subr.mxu0 0.0
    %983 = vmatpush1.msra.mxu0 0.0
    %984 = vmatprep.subr.mxu0 0.0
    %985 = vmatpush1.msra.mxu0 0.0
    %986 = vmatprep.subr.mxu0 0.0
    %987 = vmatpush1.msra.mxu0 0.0
    %988 = vmatprep.subr.mxu0 0.0
    %989 = vmatpush1.msra.mxu0 0.0
    %990 = vmatprep.subr.mxu0 0.0
    %991 = vmatpush1.msra.mxu0 0.0
    %992 = vmatprep.subr.mxu0 0.0
    %993 = vmatpush1.msra.mxu0 0.0
    %994 = vmatprep.mubr.f32.mxu0 0.0
    %995 = vmatmul.mubr.f32.gmra.mrb[0].mxu0 %v928
    %v996 = vpop.f32.mrb[0].mxu0
    %v997 = vadd.f32 0.0, %v996
    %v998 = vpop.f32.mrb[0].mxu0
    %999 = vdwg.mxu0
    %v1000 = vadd.f32 %v927, %v997
    %v1001 = vxor.u32 %v1000, 2147483648
    %v1002 = vmul.f32 %v1001, 1.442695
    %v1003 = vpow.pop %v1002
    %v1004 = vadd.f32 %v1003, 1.0
    %v1005 = vrcp.pop %v1004
    %v1006 = vmul.f32 1.0, %v1005
    %v1007 = vmul.f32 %v1006, 2.0
    %v1008 = vsub.f32 %v1007, 1.0
    %v1009 = vmul.f32 %v1006, %v913
    %1011 = vrot.lane.b32.xlu0 %v1008, 64
    %v1012 = vpop.permute.xlu0 %1011
    %v1014 = vmul.f32 %v1006, %v1012
    %1016 = vrot.lane.b32.xlu0 %v1014, 32
    %v1017 = vpop.permute.xlu0 %1016
    %v1019 = vadd.f32 %v1009, %v1017
    %v1020 = vtanh.pop %v1019
    %1022 = vrot.lane.b32.xlu0 %v1020, 64
    %v1023 = vpop.permute.xlu0 %1022
    %v1025 = vmul.f32 %v1006, %v1023
    %1027 = vrot.lane.b32.xlu0 %v1025, 32
    %v1028 = vpop.permute.xlu0 %1027
    %s1030 = scalar_lea.vmem [#allocation3], 56
    %1031 = vst.msk [vmem:[%s1030] sm:$0xff] %vm43, %v1028
    %v1032 = vld [vmem:[#allocation3] sm:$0xff]
    %v1033 = vld [vmem:[#allocation3 + $0x8] sm:$0xff]
    %v1034 = vld [vmem:[#allocation3 + $0x10] sm:$0xff]
    %v1035 = vld [vmem:[#allocation3 + $0x18] sm:$0xff]
    %v1036 = vld [vmem:[#allocation3 + $0x20] sm:$0xff]
    %v1037 = vld [vmem:[#allocation3 + $0x28] sm:$0xff]
    %v1038 = vld [vmem:[#allocation3 + $0x30] sm:$0xff]
    %v1039 = vld [vmem:[#allocation3 + $0x38] sm:$0xff]
    %v1040 = vmax.f32 %v1032, 0.0
    %v1041 = vmax.f32 %v1033, 0.0
    %v1042 = vmax.f32 %v1034, 0.0
    %v1043 = vmax.f32 %v1035, 0.0
    %v1044 = vmax.f32 %v1036, 0.0
    %v1045 = vmax.f32 %v1037, 0.0
    %v1046 = vmax.f32 %v1038, 0.0
    %v1047 = vmax.f32 %v1039, 0.0
    %v1048 = vand.u32 2147483647, %v1032
    %v1049 = vand.u32 2147483647, %v1033
    %v1050 = vand.u32 2147483647, %v1034
    %v1051 = vand.u32 2147483647, %v1035
    %v1052 = vand.u32 2147483647, %v1036
    %v1053 = vand.u32 2147483647, %v1037
    %v1054 = vand.u32 2147483647, %v1038
    %v1055 = vand.u32 2147483647, %v1039
    %v1056 = vsub.f32 0.0, %v1048
    %v1057 = vsub.f32 0.0, %v1049
    %v1058 = vsub.f32 0.0, %v1050
    %v1059 = vsub.f32 0.0, %v1051
    %v1060 = vsub.f32 0.0, %v1052
    %v1061 = vsub.f32 0.0, %v1053
    %v1062 = vsub.f32 0.0, %v1054
    %v1063 = vsub.f32 0.0, %v1055
    %v1064 = vmul.f32 %v1056, 1.442695
    %v1065 = vpow.pop %v1064
    %v1066 = vmul.f32 %v1057, 1.442695
    %v1067 = vpow.pop %v1066
    %v1068 = vmul.f32 %v1058, 1.442695
    %v1069 = vpow.pop %v1068
    %v1070 = vmul.f32 %v1059, 1.442695
    %v1071 = vpow.pop %v1070
    %v1072 = vmul.f32 %v1060, 1.442695
    %v1073 = vpow.pop %v1072
    %v1074 = vmul.f32 %v1061, 1.442695
    %v1075 = vpow.pop %v1074
    %v1076 = vmul.f32 %v1062, 1.442695
    %v1077 = vpow.pop %v1076
    %v1078 = vmul.f32 %v1063, 1.442695
    %v1079 = vpow.pop %v1078
    %v1080 = vadd.f32 %v1065, 1.0
    %v1081 = vlog2.pop %v1080
    %v1082 = vmul.f32 %v1081, 0.6931472
    %v1083 = vmul.f32 -0.5, %v1065
    %v1084 = vadd.f32 %v1083, 1.0
    %v1085 = vmul.f32 %v1084, %v1065
    %v1086 = vand.u32 2147483647, %v1065
    %vm1087 = vcmp.lt.f32.partialorder %v1086, 0.0004427343
    %v1088 = vsel %vm1087, %v1085, %v1082
    %v1089 = vadd.f32 %v1067, 1.0
    %v1090 = vlog2.pop %v1089
    %v1091 = vmul.f32 %v1090, 0.6931472
    %v1092 = vmul.f32 -0.5, %v1067
    %v1093 = vadd.f32 %v1092, 1.0
    %v1094 = vmul.f32 %v1093, %v1067
    %v1095 = vand.u32 2147483647, %v1067
    %vm1096 = vcmp.lt.f32.partialorder %v1095, 0.0004427343
    %v1097 = vsel %vm1096, %v1094, %v1091
    %v1098 = vadd.f32 %v1069, 1.0
    %v1099 = vlog2.pop %v1098
    %v1100 = vmul.f32 %v1099, 0.6931472
    %v1101 = vmul.f32 -0.5, %v1069
    %v1102 = vadd.f32 %v1101, 1.0
    %v1103 = vmul.f32 %v1102, %v1069
    %v1104 = vand.u32 2147483647, %v1069
    %vm1105 = vcmp.lt.f32.partialorder %v1104, 0.0004427343
    %v1106 = vsel %vm1105, %v1103, %v1100
    %v1107 = vadd.f32 %v1071, 1.0
    %v1108 = vlog2.pop %v1107
    %v1109 = vmul.f32 %v1108, 0.6931472
    %v1110 = vmul.f32 -0.5, %v1071
    %v1111 = vadd.f32 %v1110, 1.0
    %v1112 = vmul.f32 %v1111, %v1071
    %v1113 = vand.u32 2147483647, %v1071
    %vm1114 = vcmp.lt.f32.partialorder %v1113, 0.0004427343
    %v1115 = vsel %vm1114, %v1112, %v1109
    %v1116 = vadd.f32 %v1073, 1.0
    %v1117 = vlog2.pop %v1116
    %v1118 = vmul.f32 %v1117, 0.6931472
    %v1119 = vmul.f32 -0.5, %v1073
    %v1120 = vadd.f32 %v1119, 1.0
    %v1121 = vmul.f32 %v1120, %v1073
    %v1122 = vand.u32 2147483647, %v1073
    %vm1123 = vcmp.lt.f32.partialorder %v1122, 0.0004427343
    %v1124 = vsel %vm1123, %v1121, %v1118
    %v1125 = vadd.f32 %v1075, 1.0
    %v1126 = vlog2.pop %v1125
    %v1127 = vmul.f32 %v1126, 0.6931472
    %v1128 = vmul.f32 -0.5, %v1075
    %v1129 = vadd.f32 %v1128, 1.0
    %v1130 = vmul.f32 %v1129, %v1075
    %v1131 = vand.u32 2147483647, %v1075
    %vm1132 = vcmp.lt.f32.partialorder %v1131, 0.0004427343
    %v1133 = vsel %vm1132, %v1130, %v1127
    %v1134 = vadd.f32 %v1077, 1.0
    %v1135 = vlog2.pop %v1134
    %v1136 = vmul.f32 %v1135, 0.6931472
    %v1137 = vmul.f32 -0.5, %v1077
    %v1138 = vadd.f32 %v1137, 1.0
    %v1139 = vmul.f32 %v1138, %v1077
    %v1140 = vand.u32 2147483647, %v1077
    %vm1141 = vcmp.lt.f32.partialorder %v1140, 0.0004427343
    %v1142 = vsel %vm1141, %v1139, %v1136
    %v1143 = vadd.f32 %v1079, 1.0
    %v1144 = vlog2.pop %v1143
    %v1145 = vmul.f32 %v1144, 0.6931472
    %v1146 = vmul.f32 -0.5, %v1079
    %v1147 = vadd.f32 %v1146, 1.0
    %v1148 = vmul.f32 %v1147, %v1079
    %v1149 = vand.u32 2147483647, %v1079
    %vm1150 = vcmp.lt.f32.partialorder %v1149, 0.0004427343
    %v1151 = vsel %vm1150, %v1148, %v1145
    %v1152 = vadd.f32 %v1040, %v1088
    %v1153 = vadd.f32 %v1041, %v1097
    %v1154 = vadd.f32 %v1042, %v1106
    %v1155 = vadd.f32 %v1043, %v1115
    %v1156 = vadd.f32 %v1044, %v1124
    %v1157 = vadd.f32 %v1045, %v1133
    %v1158 = vadd.f32 %v1046, %v1142
    %v1159 = vadd.f32 %v1047, %v1151
    %v1160 = vld [vmem:[%s4] sm:$0xff]
    %v1161 = vld [vmem:[%s4 + $0x8] sm:$0xff]
    %v1162 = vld [vmem:[%s4 + $0x10] sm:$0xff]
    %v1163 = vld [vmem:[%s4 + $0x18] sm:$0xff]
    %v1164 = vld [vmem:[%s5] sm:$0x1]
    %v1166 = vlaneseq
    %v1167 = vshrl.u32 %v1166, 7
    %v1168 = vsub.s32 0, %v1167
    %v1169 = vrot.slane %v1164, %v1168
    %v1172 = vsel %vm43, %v1152, 0
    %v1175 = vsel %vm43, %v1153, 0
    %v1178 = vsel %vm43, %v1154, 0
    %v1181 = vsel %vm43, %v1155, 0
    %v1184 = vsel %vm43, %v1156, 0
    %v1187 = vsel %vm43, %v1157, 0
    %v1190 = vsel %vm43, %v1158, 0
    %v1193 = vsel %vm43, %v1159, 0
    %1195 = vmatprep.subr.mxu0 0.0
    %1196 = vmatpush1.msra.mxu0 %v1160
    %1197 = vmatprep.subr.mxu0 0.0
    %1198 = vmatpush1.msra.mxu0 %v1161
    %1199 = vmatprep.subr.mxu0 0.0
    %1200 = vmatpush1.msra.mxu0 %v1162
    %1201 = vmatprep.subr.mxu0 0.0
    %1202 = vmatpush1.msra.mxu0 %v1163
    %1203 = vmatprep.subr.mxu0 0.0
    %1204 = vmatpush1.msra.mxu0 0.0
    %1205 = vmatprep.subr.mxu0 0.0
    %1206 = vmatpush1.msra.mxu0 0.0
    %1207 = vmatprep.subr.mxu0 0.0
    %1208 = vmatpush1.msra.mxu0 0.0
    %1209 = vmatprep.subr.mxu0 0.0
    %1210 = vmatpush1.msra.mxu0 0.0
    %1211 = vmatprep.subr.mxu0 0.0
    %1212 = vmatpush1.msra.mxu0 0.0
    %1213 = vmatprep.subr.mxu0 0.0
    %1214 = vmatpush1.msra.mxu0 0.0
    %1215 = vmatprep.subr.mxu0 0.0
    %1216 = vmatpush1.msra.mxu0 0.0
    %1217 = vmatprep.subr.mxu0 0.0
    %1218 = vmatpush1.msra.mxu0 0.0
    %1219 = vmatprep.subr.mxu0 0.0
    %1220 = vmatpush1.msra.mxu0 0.0
    %1221 = vmatprep.subr.mxu0 0.0
    %1222 = vmatpush1.msra.mxu0 0.0
    %1223 = vmatprep.subr.mxu0 0.0
    %1224 = vmatpush1.msra.mxu0 0.0
    %1225 = vmatprep.subr.mxu0 0.0
    %1226 = vmatpush1.msra.mxu0 0.0
    %1227 = vmatprep.subr.mxu0 0.0
    %1228 = vmatpush1.msra.mxu0 0.0
    %1229 = vmatprep.subr.mxu0 0.0
    %1230 = vmatpush1.msra.mxu0 0.0
    %1231 = vmatprep.subr.mxu0 0.0
    %1232 = vmatpush1.msra.mxu0 0.0
    %1233 = vmatprep.subr.mxu0 0.0
    %1234 = vmatpush1.msra.mxu0 0.0
    %1235 = vmatprep.subr.mxu0 0.0
    %1236 = vmatpush1.msra.mxu0 0.0
    %1237 = vmatprep.subr.mxu0 0.0
    %1238 = vmatpush1.msra.mxu0 0.0
    %1239 = vmatprep.subr.mxu0 0.0
    %1240 = vmatpush1.msra.mxu0 0.0
    %1241 = vmatprep.subr.mxu0 0.0
    %1242 = vmatpush1.msra.mxu0 0.0
    %1243 = vmatprep.subr.mxu0 0.0
    %1244 = vmatpush1.msra.mxu0 0.0
    %1245 = vmatprep.subr.mxu0 0.0
    %1246 = vmatpush1.msra.mxu0 0.0
    %1247 = vmatprep.subr.mxu0 0.0
    %1248 = vmatpush1.msra.mxu0 0.0
    %1249 = vmatprep.subr.mxu0 0.0
    %1250 = vmatpush1.msra.mxu0 0.0
    %1251 = vmatprep.subr.mxu0 0.0
    %1252 = vmatpush1.msra.mxu0 0.0
    %1253 = vmatprep.subr.mxu0 0.0
    %1254 = vmatpush1.msra.mxu0 0.0
    %1255 = vmatprep.subr.mxu0 0.0
    %1256 = vmatpush1.msra.mxu0 0.0
    %1257 = vmatprep.subr.mxu0 0.0
    %1258 = vmatpush1.msra.mxu0 0.0
    %1259 = vmatprep.mubr.f32.mxu0 0.0
    %1260 = vmatmul.mubr.f32.gmra.mrb[0].mxu0 %v1172
    %v1261 = vpop.f32.mrb[0].mxu0
    %v1262 = vadd.f32 %v1169, %v1261
    %v1263 = vpop.f32.mrb[0].mxu0
    %1264 = vmatprep.mubr.f32.mxu0 0.0
    %1265 = vmatmul.mubr.f32.gmra.mrb[0].mxu0 %v1175
    %v1266 = vpop.f32.mrb[0].mxu0
    %v1267 = vadd.f32 %v1169, %v1266
    %v1268 = vpop.f32.mrb[0].mxu0
    %1269 = vmatprep.mubr.f32.mxu0 0.0
    %1270 = vmatmul.mubr.f32.gmra.mrb[0].mxu0 %v1178
    %v1271 = vpop.f32.mrb[0].mxu0
    %v1272 = vadd.f32 %v1169, %v1271
    %v1273 = vpop.f32.mrb[0].mxu0
    %1274 = vmatprep.mubr.f32.mxu0 0.0
    %1275 = vmatmul.mubr.f32.gmra.mrb[0].mxu0 %v1181
    %v1276 = vpop.f32.mrb[0].mxu0
    %v1277 = vadd.f32 %v1169, %v1276
    %v1278 = vpop.f32.mrb[0].mxu0
    %1279 = vmatprep.mubr.f32.mxu0 0.0
    %1280 = vmatmul.mubr.f32.gmra.mrb[0].mxu0 %v1184
    %v1281 = vpop.f32.mrb[0].mxu0
    %v1282 = vadd.f32 %v1169, %v1281
    %v1283 = vpop.f32.mrb[0].mxu0
    %1284 = vmatprep.mubr.f32.mxu0 0.0
    %1285 = vmatmul.mubr.f32.gmra.mrb[0].mxu0 %v1187
    %v1286 = vpop.f32.mrb[0].mxu0
    %v1287 = vadd.f32 %v1169, %v1286
    %v1288 = vpop.f32.mrb[0].mxu0
    %1289 = vmatprep.mubr.f32.mxu0 0.0
    %1290 = vmatmul.mubr.f32.gmra.mrb[0].mxu0 %v1190
    %v1291 = vpop.f32.mrb[0].mxu0
    %v1292 = vadd.f32 %v1169, %v1291
    %v1293 = vpop.f32.mrb[0].mxu0
    %1294 = vmatprep.mubr.f32.mxu0 0.0
    %1295 = vmatmul.mubr.f32.gmra.mrb[0].mxu0 %v1193
    %v1296 = vpop.f32.mrb[0].mxu0
    %v1297 = vadd.f32 %v1169, %v1296
    %v1298 = vpop.f32.mrb[0].mxu0
    %1299 = vdwg.mxu0
    %v1300 = vlaneseq
    %v1301 = vand.u32 %v1300, 127
    %vm1302 = vcmp.ge.s32.totalorder %v1301, 8
    %vm1303 = vcmp.lt.s32.totalorder %v1301, 16
    %vm1304 = vmand %vm1302, %vm1303
    %v1305 = vtanh.pop %v1262
    %v1306 = vtanh.pop %v1267
    %v1307 = vtanh.pop %v1272
    %v1308 = vtanh.pop %v1277
    %v1309 = vtanh.pop %v1282
    %v1310 = vtanh.pop %v1287
    %v1311 = vtanh.pop %v1292
    %v1312 = vtanh.pop %v1297
    %v1313 = vsel %vm1304, 1, 0
    %vm1314 = vcmp.eq.s32.totalorder %v1313, 1
    %v1315 = vsel %vm1314, %v1305, %v1262
    %v1316 = vsel %vm1314, %v1306, %v1267
    %v1317 = vsel %vm1314, %v1307, %v1272
    %v1318 = vsel %vm1314, %v1308, %v1277
    %v1319 = vsel %vm1314, %v1309, %v1282
    %v1320 = vsel %vm1314, %v1310, %v1287
    %v1321 = vsel %vm1314, %v1311, %v1292
    %v1322 = vsel %vm1314, %v1312, %v1297
    %1323 = vst [vmem:[#allocation4] sm:$0xff] %v1315
    %1324 = vst [vmem:[#allocation4 + $0x8] sm:$0xff] %v1316
    %1325 = vst [vmem:[#allocation4 + $0x10] sm:$0xff] %v1317
    %1326 = vst [vmem:[#allocation4 + $0x18] sm:$0xff] %v1318
    %1327 = vst [vmem:[#allocation4 + $0x20] sm:$0xff] %v1319
    %1328 = vst [vmem:[#allocation4 + $0x28] sm:$0xff] %v1320
    %1329 = vst [vmem:[#allocation4 + $0x30] sm:$0xff] %v1321
    %1330 = vst [vmem:[#allocation4 + $0x38] sm:$0xff] %v1322
    // Predicated region
    $region26: #{tpu_custom_call.1} parent=1 // pred_check
      _
    $region27: #{tpu_custom_call.1} parent=1 // pred_check_branch
      %1332 = sbr.rel (0) target = $region29
    $region28: #{tpu_custom_call.1} parent=1 // pred_region
      %s1334 = ssub.s32 1024, 1024
      %1335 = vsyncadd [#allocation5], %s1334
      %s1336 = sshll.u32 [#allocation4], 4
      %s1337 = int_to_ptr.vmem [resolvable:$true] %s1336
      %1342 = dma.vmem_to_hbm [thread:$0]  %s1337, 1024, %s6, [#allocation5], 128, 128, 8
    $region29: #{tpu_custom_call.1} parent=1 // pred_fallthru
      _
    // Predicated region
    $region30: #{tpu_custom_call.1} parent=1 // pred_check
      _
    $region31: #{tpu_custom_call.1} parent=1 // pred_check_branch
      %1344 = sbr.rel (0) target = $region33
    $region32: #{tpu_custom_call.1} parent=1 // pred_region
      %1345 = dma.done [#allocation5], 1024
    $region33: #{tpu_custom_call.1} parent=1 // pred_fallthru
      _
    %1346 = vsyncpa [#allocation5], 1

</llo_original>
